<compile_context>
chip_gen: v6e
topology: v6e:2x2x1
jax: 0.10.0
libtpu: 0.0.40
codegen_flags: <defaults>
</compile_context>

<pallas_src>
import functools
import numpy as np

import jax
import jax.numpy as jnp
from jax.experimental import pallas as pl
from jax.experimental.pallas import tpu as pltpu


def wmsa_kernel(pids_ref, x_ref, wqkv_ref, bqkv_ref, bias_tbl_ref, wout_ref, bout_ref,
                o_ref, attn_ref, *, n_heads, head_dim, n_windows, window_tokens,
                mxu_dtype, exact):
    """One grid step: full attention for `n_windows` windows of `window_tokens` tokens."""
    C = n_heads * head_dim
    wb, N = n_windows, window_tokens
    i = pl.program_id(0)

    x = x_ref[...]                                                 # (wb*N, C), compute dtype
    # QKV projection: one (wb*N, C) @ (C, 3C) MXU matmul, f32 accumulation.
    qkv = jnp.dot(x, wqkv_ref[...],
                  preferred_element_type=jnp.float32) + bqkv_ref[...]   # (wb*N, 3C) f32

    # Gather per-window (relative bias + shift mask) from the deduplicated pattern table
    # (bf16 in HBM/VMEM); cast to f32 before the add.
    base = i * wb
    bias_blk = jnp.stack(
        [bias_tbl_ref[pids_ref[base + wi]] for wi in range(wb)], axis=0
    ).astype(jnp.float32)                                          # (wb, n_heads, N, N)

    for h in range(n_heads):                                       # static, tiny, unrolled
        lo = h * head_dim
        qh = qkv[:, lo:lo + head_dim].astype(mxu_dtype).reshape(wb, N, head_dim)
        kh = qkv[:, C + lo:C + lo + head_dim].astype(mxu_dtype).reshape(wb, N, head_dim)
        vh = qkv[:, 2 * C + lo:2 * C + lo + head_dim].astype(mxu_dtype).reshape(wb, N, head_dim)

        # Window-batched attention scores (softmax scale already folded into W_q).
        sim = jnp.einsum('wnd,wmd->wnm', qh, kh,
                         preferred_element_type=jnp.float32)       # (wb, N, N) f32
        sim = sim + bias_blk[:, h]
        sim = sim - jnp.max(sim, axis=-1, keepdims=True)
        p = jnp.exp(sim)
        denom = jnp.sum(p, axis=-1, keepdims=True)
        if exact:
            probs = p / denom                                      # exact f32 path
        else:
            probs = p * pl.reciprocal(denom, approx=True)          # EUP slot, off the VALU

        pv = jnp.einsum('wnm,wmd->wnd', probs.astype(mxu_dtype), vh,
                        preferred_element_type=jnp.float32)        # (wb, N, head_dim)
        # Write directly into the per-head channel slice of the VMEM accumulator
        # ('h ... c -> ... (h c)' without a concatenate relayout).
        attn_ref[:, lo:lo + head_dim] = pv.reshape(wb * N, head_dim).astype(attn_ref.dtype)

    y = jnp.dot(attn_ref[...], wout_ref[...],
                preferred_element_type=jnp.float32) + bout_ref[...]
    o_ref[...] = y.astype(o_ref.dtype)


def _relative_bias(rel_params, ws):
    """rel_params: (n_heads, 2*ws-1, 2*ws-1) -> (n_heads, ws*ws, ws*ws)."""
    coords = np.stack(np.meshgrid(np.arange(ws), np.arange(ws), indexing="ij"),
                      axis=-1).reshape(-1, 2)
    relation = coords[:, None, :] - coords[None, :, :] + ws - 1    # (N, N, 2)
    return rel_params[:, relation[:, :, 0], relation[:, :, 1]]


_MASK_NEG = np.float32(-1e30)   # large finite negative (NaN-safe, bf16-representable)


def _mask_patterns(hw, ww, ws, shift, attn_type):
    """Deduplicated additive-mask table + per-window pattern id.

    'W'  -> 1 pattern (all zeros); 'SW' -> 4 patterns: none / last-col / last-row / both.
    """
    N = ws * ws
    if attn_type == 'W' or shift == 0:
        return np.zeros((1, N, N), np.float32), np.zeros((hw * ww,), np.int32)
    s = ws - shift
    p1 = np.repeat(np.arange(ws), ws)      # token row within window, order (p1 p2)
    p2 = np.tile(np.arange(ws), ws)        # token col within window
    row = (p1[:, None] < s) != (p1[None, :] < s)
    col = (p2[:, None] < s) != (p2[None, :] < s)
    masks_bool = np.stack([np.zeros((N, N), bool), col, row, row | col], axis=0)
    masks = np.where(masks_bool, _MASK_NEG, np.float32(0.0)).astype(np.float32)
    w1 = np.arange(hw)[:, None]
    w2 = np.arange(ww)[None, :]
    ids = (2 * (w1 == hw - 1) + (w2 == ww - 1)).astype(np.int32).reshape(-1)   # (nw,)
    return masks, ids


def _shift_mask(hw, ww, ws, shift, attn_type):
    """Full per-window additive mask (hw*ww, N, N) — used by the pure-JAX reference."""
    m = np.zeros((hw, ww, ws, ws, ws, ws), dtype=bool)
    if attn_type != 'W':
        s = ws - shift
        m[-1, :, :s, :, s:, :] = True
        m[-1, :, s:, :, :s, :] = True
        m[:, -1, :, :s, :, s:] = True
        m[:, -1, :, s:, :, :s] = True
    m = m.reshape(hw * ww, ws * ws, ws * ws)
    return jnp.where(jnp.asarray(m), jnp.float32(_MASK_NEG), jnp.float32(0.0))


def _pick_windows_per_block(total_windows, window_tokens, *, row_cap=512, min_steps=2):
    """Largest divisor of total_windows with wb*N <= row_cap and >= min_steps grid steps.

    Prefers 128-row multiples (MXU-friendly on all generations) when available.
    """
    min_steps = min(min_steps, total_windows)
    divisors = [d for d in range(1, total_windows + 1) if total_windows % d == 0]
    ok = [d for d in divisors
          if d * window_tokens <= row_cap and total_windows // d >= min_steps]
    if not ok:
        return 1
    aligned = [d for d in ok if (d * window_tokens) % 128 == 0]
    return max(aligned) if aligned else max(ok)


def _round_up(v, m):
    return ((v + m - 1) // m) * m


def _vmem_budget_bytes(wb, N, C, Cout, n_pat, n_heads, act_bytes, bias_bytes):
    """Rough per-step VMEM footprint (lane/sublane padded), for vmem_limit_bytes."""
    def tile(rows, cols, b):
        return _round_up(max(rows, 1), 8) * _round_up(max(cols, 1), 128) * b
    rows = wb * N
    est = 0
    est += 2 * tile(rows, C, act_bytes)             # x block, double-buffered
    est += 2 * tile(rows, Cout, act_bytes)          # out block, double-buffered
    est += tile(C, 3 * C, act_bytes) + tile(1, 3 * C, 4)
    est += tile(C, Cout, act_bytes) + tile(1, Cout, 4)
    est += n_pat * n_heads * tile(N, N, bias_bytes)
    est += tile(rows, C, act_bytes)                 # per-head accumulator scratch
    est += tile(rows, 3 * C, 4)                     # qkv f32
    est += wb * n_heads * tile(N, N, 4)             # gathered bias block f32
    est += 2 * wb * tile(N, N, 4)                   # sim / probs f32
    return est


def wmsa_forward(x, params, *, window_size, head_dim, attn_type,
                 windows_per_block=None, row_cap=512, compute_dtype=jnp.bfloat16):
    B, H, W, C = x.shape
    ws = window_size
    n_heads = C // head_dim
    scale = head_dim ** (-0.5)
    shift = ws // 2 if attn_type != 'W' else 0
    Cout = params['w_out'].shape[1]
    exact = jnp.dtype(compute_dtype) == jnp.dtype(jnp.float32)
    bias_dtype = jnp.float32 if exact else jnp.bfloat16

    if shift:
        x = jnp.roll(x, shift=(-shift, -shift), axis=(1, 2))

    hw, ww = H // ws, W // ws
    nw, N = hw * ww, ws * ws
    total_windows = B * nw
    # Window partition -> token rows flattened over (batch, window): (B*nw*N, C).
    x_tok = (x.reshape(B, hw, ws, ww, ws, C)
              .transpose(0, 1, 3, 2, 4, 5)
              .reshape(total_windows * N, C)
              .astype(compute_dtype))

    wb = (windows_per_block if windows_per_block is not None
          else _pick_windows_per_block(total_windows, N, row_cap=row_cap))
    assert total_windows % wb == 0, "windows_per_block must divide B * num_windows"
    n_blocks = total_windows // wb

    # Fold the softmax scale into the Q columns of the QKV projection.
    col_scale = jnp.concatenate([jnp.full((C,), scale, jnp.float32),
                                 jnp.ones((2 * C,), jnp.float32)])
    w_qkv = (params['w_qkv'].astype(jnp.float32) * col_scale[None, :]).astype(compute_dtype)
    b_qkv = (params['b_qkv'].astype(jnp.float32) * col_scale).reshape(1, 3 * C)
    w_out = params['w_out'].astype(compute_dtype)
    b_out = params['b_out'].astype(jnp.float32).reshape(1, Cout)

    # Deduplicated (relative-position bias + shift mask) pattern table + per-window ids.
    rel_bias = _relative_bias(params['rel'], ws)                   # (n_heads, N, N) f32
    mask_tbl, win_pattern = _mask_patterns(hw, ww, ws, shift, attn_type)
    n_pat = mask_tbl.shape[0]
    bias_tbl = (rel_bias[None, :, :, :]
                + jnp.asarray(mask_tbl)[:, None, :, :]).astype(bias_dtype)  # (n_pat,h,N,N)
    pids = jnp.asarray(np.tile(win_pattern, B), dtype=jnp.int32)   # (B*nw,)

    act_bytes = jnp.dtype(compute_dtype).itemsize
    bias_bytes = jnp.dtype(bias_dtype).itemsize
    vmem_limit = int(min(64 * 2**20,
                         max(32 * 2**20,
                             2 * _vmem_budget_bytes(wb, N, C, Cout, n_pat, n_heads,
                                                    act_bytes, bias_bytes))))

    kernel = functools.partial(wmsa_kernel, n_heads=n_heads, head_dim=head_dim,
                               n_windows=wb, window_tokens=N,
                               mxu_dtype=compute_dtype, exact=exact)

    out_flat = pl.pallas_call(
        kernel,
        out_shape=jax.ShapeDtypeStruct((total_windows * N, Cout), compute_dtype),
        grid_spec=pltpu.PrefetchScalarGridSpec(
            num_scalar_prefetch=1,                                 # per-window pattern ids
            grid=(n_blocks,),
            in_specs=[
                pl.BlockSpec((wb * N, C), lambda i, pids: (i, 0)),              # token rows
                pl.BlockSpec((C, 3 * C), lambda i, pids: (0, 0)),               # W_qkv (scaled)
                pl.BlockSpec((1, 3 * C), lambda i, pids: (0, 0)),               # b_qkv (scaled)
                pl.BlockSpec((n_pat, n_heads, N, N), lambda i, pids: (0, 0, 0, 0)),  # bias table
                pl.BlockSpec((C, Cout), lambda i, pids: (0, 0)),                # W_out
                pl.BlockSpec((1, Cout), lambda i, pids: (0, 0)),                # b_out
            ],
            out_specs=pl.BlockSpec((wb * N, Cout), lambda i, pids: (i, 0)),
            scratch_shapes=[pltpu.VMEM((wb * N, C), compute_dtype)],            # head accum
        ),
        compiler_params=pltpu.CompilerParams(
            dimension_semantics=("parallel",),
            vmem_limit_bytes=vmem_limit),
    )(pids, x_tok, w_qkv, b_qkv, bias_tbl, w_out, b_out)

    # Window un-partition: (B*nw*N, Cout) -> (B, H, W, Cout).
    out = (out_flat.astype(jnp.float32)
                  .reshape(B, hw, ww, ws, ws, Cout)
                  .transpose(0, 1, 3, 2, 4, 5)
                  .reshape(B, H, W, Cout))
    if shift:
        out = jnp.roll(out, shift=(shift, shift), axis=(1, 2))
    return out


def wmsa_reference(x, params, *, window_size, head_dim, attn_type):
    """Pure-JAX replica of the PyTorch forward for validation (full per-window mask)."""
    B, H, W, C = x.shape
    ws = window_size
    n_heads = C // head_dim
    scale = head_dim ** (-0.5)
    shift = ws // 2 if attn_type != 'W' else 0
    Cout = params['w_out'].shape[1]

    if shift:
        x = jnp.roll(x, shift=(-shift, -shift), axis=(1, 2))
    hw, ww = H // ws, W // ws
    nw, N = hw * ww, ws * ws
    xw = (x.reshape(B, hw, ws, ww, ws, C).transpose(0, 1, 3, 2, 4, 5)
           .reshape(B, nw, N, C))
    qkv = xw @ params['w_qkv'] + params['b_qkv']                   # (B, nw, N, 3C)
    qkv = qkv.reshape(B, nw, N, 3 * n_heads, head_dim).transpose(3, 0, 1, 2, 4)
    q, k, v = qkv[:n_heads], qkv[n_heads:2 * n_heads], qkv[2 * n_heads:]
    sim = jnp.einsum('hbwpc,hbwqc->hbwpq', q, k) * scale
    sim = sim + _relative_bias(params['rel'], ws)[:, None, None]
    sim = sim + _shift_mask(hw, ww, ws, shift, attn_type)[None, None]
    probs = jax.nn.softmax(sim, axis=-1)
    out = jnp.einsum('hbwij,hbwjc->hbwic', probs, v)
    out = out.transpose(1, 2, 3, 0, 4).reshape(B, nw, N, C)
    out = out @ params['w_out'] + params['b_out']
    out = (out.reshape(B, hw, ww, ws, ws, Cout).transpose(0, 1, 3, 2, 4, 5)
              .reshape(B, H, W, Cout))
    if shift:
        out = jnp.roll(out, shift=(shift, shift), axis=(1, 2))
    return out


if __name__ == "__main__":
    # input_dim=16, head_dim=8 -> 2 heads; window_size=4, spatial 8x8 -> 2x2 windows;
    # shifted ('SW') variant exercises the masked-attention pattern table.
    B, H, W = 2, 8, 8
    input_dim, output_dim, head_dim, window_size = 16, 16, 8, 4
    n_heads = input_dim // head_dim

    key = jax.random.PRNGKey(0)
    k1, k2, k3, k4, k5, kx = jax.random.split(key, 6)
    params = {
        'w_qkv': jax.random.normal(k1, (input_dim, 3 * input_dim), jnp.float32) * 0.05,
        'b_qkv': jax.random.normal(k2, (3 * input_dim,), jnp.float32) * 0.02,
        'w_out': jax.random.normal(k3, (input_dim, output_dim), jnp.float32) * 0.05,
        'b_out': jax.random.normal(k4, (output_dim,), jnp.float32) * 0.02,
        # trunc_normal_(std=0.02) stand-in: deterministic normal * 0.02
        'rel': jax.random.normal(k5, (n_heads, 2 * window_size - 1, 2 * window_size - 1),
                                 jnp.float32) * 0.02,
    }
    x = jax.random.normal(kx, (B, H, W, input_dim), jnp.float32)

    for attn_type, tol_f32, tol_bf16 in (('SW', 2e-3, 1e-2), ('W', 2e-3, 1e-2)):
        ref = wmsa_reference(x, params, window_size=window_size,
                             head_dim=head_dim, attn_type=attn_type)

        # Exact f32 path (f32 matmuls, exact softmax normalization): tight check.
        out_f32 = jax.block_until_ready(
            wmsa_forward(x, params, window_size=window_size, head_dim=head_dim,
                         attn_type=attn_type, compute_dtype=jnp.float32))
        np.testing.assert_allclose(np.asarray(out_f32), np.asarray(ref),
                                   atol=tol_f32, rtol=tol_f32)

        # Default path: bf16 MXU operands / bf16 bias / bf16 output, f32 accumulation.
        out_bf16 = jax.block_until_ready(
            wmsa_forward(x, params, window_size=window_size, head_dim=head_dim,
                         attn_type=attn_type))
        np.testing.assert_allclose(np.asarray(out_bf16), np.asarray(ref),
                                   atol=tol_bf16, rtol=tol_bf16)

    print("KERNEL_OK")
</pallas_src>

<mosaic_0001>
module attributes {stable_mosaic.version = 11 : i64} {
  func.func @wmsa_kernel(%arg0: i32, %arg1: memref<8xi32, #tpu.memory_space<smem>>, %arg2: memref<64x16xf32, #tpu.memory_space<vmem>>, %arg3: memref<16x48xf32, #tpu.memory_space<vmem>>, %arg4: memref<1x48xf32, #tpu.memory_space<vmem>>, %arg5: memref<4x2x16x16xf32, #tpu.memory_space<vmem>>, %arg6: memref<16x16xf32, #tpu.memory_space<vmem>>, %arg7: memref<1x16xf32, #tpu.memory_space<vmem>>, %arg8: memref<64x16xf32, #tpu.memory_space<vmem>>, %arg9: memref<64x16xf32, #tpu.memory_space<vmem>>) attributes {dimension_semantics = [#tpu.dimension_semantics<parallel>], iteration_bounds = array<i64: 2>, scalar_prefetch = 1 : i64, scratch_operands = 1 : i64, tpu.core_type = #tpu.core_type<tc>, window_params = [{transform_indices = @transform_0, window_bounds = array<i64: 64, 16>}, {pipeline_mode = #tpu.pipeline_mode<synchronous>, transform_indices = @transform_1, window_bounds = array<i64: 16, 48>}, {pipeline_mode = #tpu.pipeline_mode<synchronous>, transform_indices = @transform_2, window_bounds = array<i64: 1, 48>}, {pipeline_mode = #tpu.pipeline_mode<synchronous>, transform_indices = @transform_3, window_bounds = array<i64: 4, 2, 16, 16>}, {pipeline_mode = #tpu.pipeline_mode<synchronous>, transform_indices = @transform_4, window_bounds = array<i64: 16, 16>}, {pipeline_mode = #tpu.pipeline_mode<synchronous>, transform_indices = @transform_5, window_bounds = array<i64: 1, 16>}, {transform_indices = @transform_6, window_bounds = array<i64: 64, 16>}]} {
    %c0 = arith.constant 0 : index
    %c0_0 = arith.constant 0 : index
    %0 = vector.load %arg2[%c0, %c0_0] : memref<64x16xf32, #tpu.memory_space<vmem>>, vector<64x16xf32>
    %c0_1 = arith.constant 0 : index
    %c0_2 = arith.constant 0 : index
    %1 = vector.load %arg3[%c0_1, %c0_2] : memref<16x48xf32, #tpu.memory_space<vmem>>, vector<16x48xf32>
    %cst = arith.constant dense<0.000000e+00> : vector<64x48xf32>
    %2 = tpu.matmul %0, %1, %cst {dimension_numbers = #tpu.dot_dimension_numbers<[1], [0], [0], [1], [0, 0, 1, 1], [], []>} : vector<64x16xf32>, vector<16x48xf32>, vector<64x48xf32> -> vector<64x48xf32>
    %c0_3 = arith.constant 0 : index
    %c0_4 = arith.constant 0 : index
    %3 = vector.load %arg4[%c0_3, %c0_4] : memref<1x48xf32, #tpu.memory_space<vmem>>, vector<1x48xf32>
    %4 = vector.broadcast %3 : vector<1x48xf32> to vector<64x48xf32>
    %5 = arith.addf %2, %4 : vector<64x48xf32>
    %c4_i32 = arith.constant 4 : i32
    %6 = arith.muli %arg0, %c4_i32 : i32
    %c0_i32 = arith.constant 0 : i32
    %7 = arith.addi %6, %c0_i32 : i32
    %8 = arith.index_cast %7 : i32 to index
    %9 = memref.load %arg1[%8] : memref<8xi32, #tpu.memory_space<smem>>
    %10 = arith.index_cast %9 : i32 to index
    %c0_5 = arith.constant 0 : index
    %c0_6 = arith.constant 0 : index
    %c0_7 = arith.constant 0 : index
    %11 = vector.load %arg5[%10, %c0_5, %c0_6, %c0_7] : memref<4x2x16x16xf32, #tpu.memory_space<vmem>>, vector<1x2x16x16xf32>
    %12 = vector.shape_cast %11 : vector<1x2x16x16xf32> to vector<2x16x16xf32>
    %c1_i32 = arith.constant 1 : i32
    %13 = arith.addi %6, %c1_i32 : i32
    %14 = arith.index_cast %13 : i32 to index
    %15 = memref.load %arg1[%14] : memref<8xi32, #tpu.memory_space<smem>>
    %16 = arith.index_cast %15 : i32 to index
    %c0_8 = arith.constant 0 : index
    %c0_9 = arith.constant 0 : index
    %c0_10 = arith.constant 0 : index
    %17 = vector.load %arg5[%16, %c0_8, %c0_9, %c0_10] : memref<4x2x16x16xf32, #tpu.memory_space<vmem>>, vector<1x2x16x16xf32>
    %18 = vector.shape_cast %17 : vector<1x2x16x16xf32> to vector<2x16x16xf32>
    %c2_i32 = arith.constant 2 : i32
    %19 = arith.addi %6, %c2_i32 : i32
    %20 = arith.index_cast %19 : i32 to index
    %21 = memref.load %arg1[%20] : memref<8xi32, #tpu.memory_space<smem>>
    %22 = arith.index_cast %21 : i32 to index
    %c0_11 = arith.constant 0 : index
    %c0_12 = arith.constant 0 : index
    %c0_13 = arith.constant 0 : index
    %23 = vector.load %arg5[%22, %c0_11, %c0_12, %c0_13] : memref<4x2x16x16xf32, #tpu.memory_space<vmem>>, vector<1x2x16x16xf32>
    %24 = vector.shape_cast %23 : vector<1x2x16x16xf32> to vector<2x16x16xf32>
    %c3_i32 = arith.constant 3 : i32
    %25 = arith.addi %6, %c3_i32 : i32
    %26 = arith.index_cast %25 : i32 to index
    %27 = memref.load %arg1[%26] : memref<8xi32, #tpu.memory_space<smem>>
    %28 = arith.index_cast %27 : i32 to index
    %c0_14 = arith.constant 0 : index
    %c0_15 = arith.constant 0 : index
    %c0_16 = arith.constant 0 : index
    %29 = vector.load %arg5[%28, %c0_14, %c0_15, %c0_16] : memref<4x2x16x16xf32, #tpu.memory_space<vmem>>, vector<1x2x16x16xf32>
    %30 = vector.shape_cast %29 : vector<1x2x16x16xf32> to vector<2x16x16xf32>
    %31 = vector.shape_cast %12 : vector<2x16x16xf32> to vector<1x2x16x16xf32>
    %32 = vector.shape_cast %18 : vector<2x16x16xf32> to vector<1x2x16x16xf32>
    %33 = vector.shape_cast %24 : vector<2x16x16xf32> to vector<1x2x16x16xf32>
    %34 = vector.shape_cast %30 : vector<2x16x16xf32> to vector<1x2x16x16xf32>
    %35 = tpu.concatenate %31, %32, %33, %34 in 0 : vector<1x2x16x16xf32>, vector<1x2x16x16xf32>, vector<1x2x16x16xf32>, vector<1x2x16x16xf32> -> vector<4x2x16x16xf32>
    %36 = vector.extract_strided_slice %5 {offsets = [0, 0], sizes = [64, 8], strides = [1, 1]} : vector<64x48xf32> to vector<64x8xf32>
    %37 = vector.shape_cast %36 : vector<64x8xf32> to vector<4x16x8xf32>
    %38 = vector.extract_strided_slice %5 {offsets = [0, 16], sizes = [64, 8], strides = [1, 1]} : vector<64x48xf32> to vector<64x8xf32>
    %39 = vector.shape_cast %38 : vector<64x8xf32> to vector<4x16x8xf32>
    %40 = vector.extract_strided_slice %5 {offsets = [0, 32], sizes = [64, 8], strides = [1, 1]} : vector<64x48xf32> to vector<64x8xf32>
    %41 = vector.shape_cast %40 : vector<64x8xf32> to vector<4x16x8xf32>
    "tpu.trace_start"() <{level = 10 : i32, message = "wnd,wmd->wnm"}> : () -> ()
    %cst_17 = arith.constant dense<0.000000e+00> : vector<4x16x16xf32>
    %42 = tpu.matmul %37, %39, %cst_17 {dimension_numbers = #tpu.dot_dimension_numbers<[2], [2], [1], [1], [0, 0, 0, 1, 1, 1], [0], [0]>} : vector<4x16x8xf32>, vector<4x16x8xf32>, vector<4x16x16xf32> -> vector<4x16x16xf32>
    "tpu.trace_stop"() : () -> ()
    %43 = vector.extract_strided_slice %35 {offsets = [0, 0, 0, 0], sizes = [4, 1, 16, 16], strides = [1, 1, 1, 1]} : vector<4x2x16x16xf32> to vector<4x1x16x16xf32>
    %44 = vector.shape_cast %43 : vector<4x1x16x16xf32> to vector<4x16x16xf32>
    %45 = arith.addf %42, %44 : vector<4x16x16xf32>
    %cst_18 = arith.constant dense<0xFF800000> : vector<4x16xf32>
    %46 = vector.multi_reduction <maximumf>, %45, %cst_18 [2] : vector<4x16x16xf32> to vector<4x16xf32>
    %47 = vector.shape_cast %46 : vector<4x16xf32> to vector<4x16x1xf32>
    %48 = vector.broadcast %47 : vector<4x16x1xf32> to vector<4x16x16xf32>
    %49 = arith.subf %45, %48 : vector<4x16x16xf32>
    %50 = math.exp %49 : vector<4x16x16xf32>
    %cst_19 = arith.constant dense<0.000000e+00> : vector<4x16xf32>
    %51 = vector.multi_reduction <add>, %50, %cst_19 [2] : vector<4x16x16xf32> to vector<4x16xf32>
    %52 = vector.shape_cast %51 : vector<4x16xf32> to vector<4x16x1xf32>
    %53 = vector.broadcast %52 : vector<4x16x1xf32> to vector<4x16x16xf32>
    %54 = arith.divf %50, %53 : vector<4x16x16xf32>
    "tpu.trace_start"() <{level = 10 : i32, message = "wnm,wmd->wnd"}> : () -> ()
    %cst_20 = arith.constant dense<0.000000e+00> : vector<4x16x8xf32>
    %55 = tpu.matmul %54, %41, %cst_20 {dimension_numbers = #tpu.dot_dimension_numbers<[2], [1], [1], [2], [0, 0, 0, 1, 1, 2], [0], [0]>} : vector<4x16x16xf32>, vector<4x16x8xf32>, vector<4x16x8xf32> -> vector<4x16x8xf32>
    "tpu.trace_stop"() : () -> ()
    %56 = vector.shape_cast %55 : vector<4x16x8xf32> to vector<64x8xf32>
    %c0_21 = arith.constant 0 : index
    %c0_22 = arith.constant 0 : index
    %57 = vector.load %arg9[%c0_21, %c0_22] : memref<64x16xf32, #tpu.memory_space<vmem>>, vector<64x8xf32>
    tpu.vector_store %arg9[%c0_21, %c0_22], %56 {strides = array<i32>} : memref<64x16xf32, #tpu.memory_space<vmem>>, vector<64x8xf32>,
    %58 = vector.extract_strided_slice %5 {offsets = [0, 8], sizes = [64, 8], strides = [1, 1]} : vector<64x48xf32> to vector<64x8xf32>
    %59 = vector.shape_cast %58 : vector<64x8xf32> to vector<4x16x8xf32>
    %60 = vector.extract_strided_slice %5 {offsets = [0, 24], sizes = [64, 8], strides = [1, 1]} : vector<64x48xf32> to vector<64x8xf32>
    %61 = vector.shape_cast %60 : vector<64x8xf32> to vector<4x16x8xf32>
    %62 = vector.extract_strided_slice %5 {offsets = [0, 40], sizes = [64, 8], strides = [1, 1]} : vector<64x48xf32> to vector<64x8xf32>
    %63 = vector.shape_cast %62 : vector<64x8xf32> to vector<4x16x8xf32>
    "tpu.trace_start"() <{level = 10 : i32, message = "wnd,wmd->wnm"}> : () -> ()
    %cst_23 = arith.constant dense<0.000000e+00> : vector<4x16x16xf32>
    %64 = tpu.matmul %59, %61, %cst_23 {dimension_numbers = #tpu.dot_dimension_numbers<[2], [2], [1], [1], [0, 0, 0, 1, 1, 1], [0], [0]>} : vector<4x16x8xf32>, vector<4x16x8xf32>, vector<4x16x16xf32> -> vector<4x16x16xf32>
    "tpu.trace_stop"() : () -> ()
    %65 = vector.extract_strided_slice %35 {offsets = [0, 1, 0, 0], sizes = [4, 1, 16, 16], strides = [1, 1, 1, 1]} : vector<4x2x16x16xf32> to vector<4x1x16x16xf32>
    %66 = vector.shape_cast %65 : vector<4x1x16x16xf32> to vector<4x16x16xf32>
    %67 = arith.addf %64, %66 : vector<4x16x16xf32>
    %cst_24 = arith.constant dense<0xFF800000> : vector<4x16xf32>
    %68 = vector.multi_reduction <maximumf>, %67, %cst_24 [2] : vector<4x16x16xf32> to vector<4x16xf32>
    %69 = vector.shape_cast %68 : vector<4x16xf32> to vector<4x16x1xf32>
    %70 = vector.broadcast %69 : vector<4x16x1xf32> to vector<4x16x16xf32>
    %71 = arith.subf %67, %70 : vector<4x16x16xf32>
    %72 = math.exp %71 : vector<4x16x16xf32>
    %cst_25 = arith.constant dense<0.000000e+00> : vector<4x16xf32>
    %73 = vector.multi_reduction <add>, %72, %cst_25 [2] : vector<4x16x16xf32> to vector<4x16xf32>
    %74 = vector.shape_cast %73 : vector<4x16xf32> to vector<4x16x1xf32>
    %75 = vector.broadcast %74 : vector<4x16x1xf32> to vector<4x16x16xf32>
    %76 = arith.divf %72, %75 : vector<4x16x16xf32>
    "tpu.trace_start"() <{level = 10 : i32, message = "wnm,wmd->wnd"}> : () -> ()
    %cst_26 = arith.constant dense<0.000000e+00> : vector<4x16x8xf32>
    %77 = tpu.matmul %76, %63, %cst_26 {dimension_numbers = #tpu.dot_dimension_numbers<[2], [1], [1], [2], [0, 0, 0, 1, 1, 2], [0], [0]>} : vector<4x16x16xf32>, vector<4x16x8xf32>, vector<4x16x8xf32> -> vector<4x16x8xf32>
    "tpu.trace_stop"() : () -> ()
    %78 = vector.shape_cast %77 : vector<4x16x8xf32> to vector<64x8xf32>
    %c0_27 = arith.constant 0 : index
    %c8 = arith.constant 8 : index
    %79 = vector.load %arg9[%c0_27, %c8] : memref<64x16xf32, #tpu.memory_space<vmem>>, vector<64x8xf32>
    tpu.vector_store %arg9[%c0_27, %c8], %78 {strides = array<i32>} : memref<64x16xf32, #tpu.memory_space<vmem>>, vector<64x8xf32>,
    %c0_28 = arith.constant 0 : index
    %c0_29 = arith.constant 0 : index
    %80 = vector.load %arg9[%c0_28, %c0_29] : memref<64x16xf32, #tpu.memory_space<vmem>>, vector<64x16xf32>
    %c0_30 = arith.constant 0 : index
    %c0_31 = arith.constant 0 : index
    %81 = vector.load %arg6[%c0_30, %c0_31] : memref<16x16xf32, #tpu.memory_space<vmem>>, vector<16x16xf32>
    %cst_32 = arith.constant dense<0.000000e+00> : vector<64x16xf32>
    %82 = tpu.matmul %80, %81, %cst_32 {dimension_numbers = #tpu.dot_dimension_numbers<[1], [0], [0], [1], [0, 0, 1, 1], [], []>} : vector<64x16xf32>, vector<16x16xf32>, vector<64x16xf32> -> vector<64x16xf32>
    %c0_33 = arith.constant 0 : index
    %c0_34 = arith.constant 0 : index
    %83 = vector.load %arg7[%c0_33, %c0_34] : memref<1x16xf32, #tpu.memory_space<vmem>>, vector<1x16xf32>
    %84 = vector.broadcast %83 : vector<1x16xf32> to vector<64x16xf32>
    %85 = arith.addf %82, %84 : vector<64x16xf32>
    %c0_35 = arith.constant 0 : index
    %c0_36 = arith.constant 0 : index
    %86 = vector.load %arg8[%c0_35, %c0_36] : memref<64x16xf32, #tpu.memory_space<vmem>>, vector<64x16xf32>
    tpu.vector_store %arg8[%c0_35, %c0_36], %85 {strides = array<i32>} : memref<64x16xf32, #tpu.memory_space<vmem>>, vector<64x16xf32>,
    return
  }
  func.func @transform_0(%arg0: i32, %arg1: memref<8xi32, #tpu.memory_space<smem>>) -> (i32, i32) {
    %c0_i32 = arith.constant 0 : i32
    %c0_i32_0 = arith.constant 0 : i32
    return %arg0, %c0_i32 : i32, i32
  }
  func.func @transform_1(%arg0: i32, %arg1: memref<8xi32, #tpu.memory_space<smem>>) -> (i32, i32) {
    %c0_i32 = arith.constant 0 : i32
    %c0_i32_0 = arith.constant 0 : i32
    %c0_i32_1 = arith.constant 0 : i32
    return %c0_i32, %c0_i32_0 : i32, i32
  }
  func.func @transform_2(%arg0: i32, %arg1: memref<8xi32, #tpu.memory_space<smem>>) -> (i32, i32) {
    %c0_i32 = arith.constant 0 : i32
    %c0_i32_0 = arith.constant 0 : i32
    %c0_i32_1 = arith.constant 0 : i32
    return %c0_i32, %c0_i32_0 : i32, i32
  }
  func.func @transform_3(%arg0: i32, %arg1: memref<8xi32, #tpu.memory_space<smem>>) -> (i32, i32, i32, i32) {
    %c0_i32 = arith.constant 0 : i32
    %c0_i32_0 = arith.constant 0 : i32
    %c0_i32_1 = arith.constant 0 : i32
    %c0_i32_2 = arith.constant 0 : i32
    %c0_i32_3 = arith.constant 0 : i32
    return %c0_i32, %c0_i32_0, %c0_i32_1, %c0_i32_2 : i32, i32, i32, i32
  }
  func.func @transform_4(%arg0: i32, %arg1: memref<8xi32, #tpu.memory_space<smem>>) -> (i32, i32) {
    %c0_i32 = arith.constant 0 : i32
    %c0_i32_0 = arith.constant 0 : i32
    %c0_i32_1 = arith.constant 0 : i32
    return %c0_i32, %c0_i32_0 : i32, i32
  }
  func.func @transform_5(%arg0: i32, %arg1: memref<8xi32, #tpu.memory_space<smem>>) -> (i32, i32) {
    %c0_i32 = arith.constant 0 : i32
    %c0_i32_0 = arith.constant 0 : i32
    %c0_i32_1 = arith.constant 0 : i32
    return %c0_i32, %c0_i32_0 : i32, i32
  }
  func.func @transform_6(%arg0: i32, %arg1: memref<8xi32, #tpu.memory_space<smem>>) -> (i32, i32) {
    %c0_i32 = arith.constant 0 : i32
    %c0_i32_0 = arith.constant 0 : i32
    return %arg0, %c0_i32 : i32, i32
  }
}

</mosaic_0001>

<llo_original>
// kernel: tpu_custom_call.1
$region0: #{tpu_custom_call.1}
  #allocation0 [shape = 'u32[]', space=smem, size = 0x4, offset = 0x4, fixed_abs, tag = 'smem constant byte address 0x4 - core index']
  #allocation1 [shape = 'u32[144,128]{1,0:T(1,128)}', space=vmem, size = 0x12000, scoped, tag = 'internal scratch']
  #allocation2 [shape = 'f32[64,16]{1,0:T(8,128)}', space=vmem, size = 0x8000, scoped, tag = 'scratch operand']
  #allocation3 [shape = 's32[1]{0}', space=sflag, size = 0x4, scoped, tag = 'scoped memory for tpu_custom_call.1']
  #allocation4 [shape = 'u8[512]{0}', space=smem, size = 0x200, scoped, tag = 'prefetched SMEM operand 0']
  %s0 = inlined_call_operand.vmem [shape: s32[8], index: 0, kind: input, shape index: {}]
  %s1 = inlined_call_operand.vmem [shape: f32[128,16], index: 1, kind: input, shape index: {}]
  %s2 = inlined_call_operand.vmem [shape: f32[16,48], index: 2, kind: input, shape index: {}]
  %s3 = inlined_call_operand.vmem [shape: f32[1,48], index: 3, kind: input, shape index: {}]
  %s4 = inlined_call_operand.vmem [shape: f32[4,2,16,16], index: 4, kind: input, shape index: {}]
  %s5 = inlined_call_operand.hbm [shape: f32[16,16], index: 5, kind: input, shape index: {}]
  %s6 = inlined_call_operand.vmem [shape: f32[1,16], index: 6, kind: input, shape index: {}]
  %s7 = inlined_call_operand.vmem [shape: f32[128,16], index: 7, kind: output, shape index: {}]
  %s8 = sld [smem:[#allocation0]]
  $region61: #{tpu_custom_call.1} parent=0
    _
  %s10 = ssub.s32 1, %s8
  %s11 = scalar_select 0, %s10, %s8
  %s12 = sshll.u32 %s0, 4
  %s13 = int_to_ptr.vmem [resolvable:$true] %s12
  %15 = dma.vmem_to_smem %s13, 16, [#allocation4], [#allocation3]
  %16 = dma.done [#allocation3], 16
  %17 = sfence
  $region1: #{tpu_custom_call.1} parent=0
    #allocation5 [shape = 'u8[8192]{0}', space=vmem, size = 0x2000, scoped, tag = 'input window, operand 5, single buffered']
    #allocation6 [shape = 's32[2]{0}', space=sflag, size = 0x8, scoped, tag = 'scoped memory for tpu_custom_call.1']
    %18 = vsyncpa [#allocation6], 0
    loop: start=0, step=1, limit=4
    $region2: #{tpu_custom_call.1} parent=1 // loop_pre_header
      _
    $region3: #{tpu_custom_call.1} parent=1 // loop_header
      %s20 = sphi 0, %s24
      %p21 = scmp.ge.s32.totalorder %s20, 4
      %s30 = sphi 0, %s32
      %s33 = sphi 0, %s30
      %s34 = sphi 0, %s33
      %s50 = sphi 0, %s34
      %s54 = sphi 0, %s54
      %s56 = sphi 0, %s54
      %s57 = sphi 0, %s56
      %s71 = sphi 0, %s57
      %s75 = sphi 0, %s75
      %s77 = sphi 0, %s75
      %s78 = sphi 0, %s77
      %s92 = sphi 0, %s78
      %s96 = sphi 0, %s96
      %s98 = sphi 0, %s96
      %s99 = sphi 0, %s98
      %s113 = sphi 0, %s99
      %s117 = sphi 0, %s117
      %s119 = sphi 0, %s117
      %s120 = sphi 0, %s119
      %s134 = sphi 0, %s120
      %s138 = sphi 0, %s138
      %s140 = sphi 0, %s138
      %s141 = sphi 0, %s140
      %s155 = sphi 0, %s141
      %s161 = sphi 0, %s163
      %s164 = sphi 0, %s161
      %s165 = sphi 0, %s164
      %s181 = sphi 0, %s165
    $region4: #{tpu_custom_call.1} parent=1 // loop_header_branch
      %23 = sbr.rel (%p21) target = $region8
    $region5: #{tpu_custom_call.1} parent=1 // loop_body
      %s25 = ssub.s32 %s20, 1
      %s26 = ssub.s32 %s20, 2
      %s27 = sadd.s32 %s20, 1
      %s28 = ssub.s32 %s20, %s27
      %p29 = scmp.eq.s32.totalorder %s28, 0
      %s31 = sadd.s32 %s30, 1
      %s32 = scalar_select %p29, %s30, %s31
      %p35 = pneg %p29
      %p36 = scmp.eq.s32.totalorder %s20, 1
      %p37 = por %p35, %p36
      %p38 = scmp.ne.s32.totalorder %s30, %s33
      %p39 = scmp.eq.s32.totalorder %s20, 0
      %p40 = por %p38, %p39
      %p41 = scmp.ne.s32.totalorder %s30, %s33
      %p42 = scmp.eq.s32.totalorder %s25, 1
      %p43 = por %p41, %p42
      %p44 = scmp.ne.s32.totalorder %s33, %s34
      %p45 = scmp.eq.s32.totalorder %s25, 0
      %p46 = por %p44, %p45
      %p47 = scmp.ne.s32.totalorder %s33, %s34
      %p48 = scmp.eq.s32.totalorder %s26, 1
      %p49 = por %p47, %p48
      %p51 = scmp.ne.s32.totalorder %s34, %s50
      %p52 = scmp.eq.s32.totalorder %s26, 0
      %p53 = por %p51, %p52
      %s55 = sadd.s32 %s54, 1
      %p58 = scmp.eq.s32.totalorder %s20, 1
      %p59 = scmp.ne.s32.totalorder %s54, %s56
      %p60 = scmp.eq.s32.totalorder %s20, 0
      %p61 = por %p59, %p60
      %p62 = scmp.ne.s32.totalorder %s54, %s56
      %p63 = scmp.eq.s32.totalorder %s25, 1
      %p64 = por %p62, %p63
      %p65 = scmp.ne.s32.totalorder %s56, %s57
      %p66 = scmp.eq.s32.totalorder %s25, 0
      %p67 = por %p65, %p66
      %p68 = scmp.ne.s32.totalorder %s56, %s57
      %p69 = scmp.eq.s32.totalorder %s26, 1
      %p70 = por %p68, %p69
      %p72 = scmp.ne.s32.totalorder %s57, %s71
      %p73 = scmp.eq.s32.totalorder %s26, 0
      %p74 = por %p72, %p73
      %s76 = sadd.s32 %s75, 1
      %p79 = scmp.eq.s32.totalorder %s20, 1
      %p80 = scmp.ne.s32.totalorder %s75, %s77
      %p81 = scmp.eq.s32.totalorder %s20, 0
      %p82 = por %p80, %p81
      %p83 = scmp.ne.s32.totalorder %s75, %s77
      %p84 = scmp.eq.s32.totalorder %s25, 1
      %p85 = por %p83, %p84
      %p86 = scmp.ne.s32.totalorder %s77, %s78
      %p87 = scmp.eq.s32.totalorder %s25, 0
      %p88 = por %p86, %p87
      %p89 = scmp.ne.s32.totalorder %s77, %s78
      %p90 = scmp.eq.s32.totalorder %s26, 1
      %p91 = por %p89, %p90
      %p93 = scmp.ne.s32.totalorder %s78, %s92
      %p94 = scmp.eq.s32.totalorder %s26, 0
      %p95 = por %p93, %p94
      %s97 = sadd.s32 %s96, 1
      %p100 = scmp.eq.s32.totalorder %s20, 1
      %p101 = scmp.ne.s32.totalorder %s96, %s98
      %p102 = scmp.eq.s32.totalorder %s20, 0
      %p103 = por %p101, %p102
      %p104 = scmp.ne.s32.totalorder %s96, %s98
      %p105 = scmp.eq.s32.totalorder %s25, 1
      %p106 = por %p104, %p105
      %p107 = scmp.ne.s32.totalorder %s98, %s99
      %p108 = scmp.eq.s32.totalorder %s25, 0
      %p109 = por %p107, %p108
      %p110 = scmp.ne.s32.totalorder %s98, %s99
      %p111 = scmp.eq.s32.totalorder %s26, 1
      %p112 = por %p110, %p111
      %p114 = scmp.ne.s32.totalorder %s99, %s113
      %p115 = scmp.eq.s32.totalorder %s26, 0
      %p116 = por %p114, %p115
      %s118 = sadd.s32 %s117, 1
      %p121 = scmp.eq.s32.totalorder %s20, 1
      %p122 = scmp.ne.s32.totalorder %s117, %s119
      %p123 = scmp.eq.s32.totalorder %s20, 0
      %p124 = por %p122, %p123
      %p125 = scmp.ne.s32.totalorder %s117, %s119
      %p126 = scmp.eq.s32.totalorder %s25, 1
      %p127 = por %p125, %p126
      %p128 = scmp.ne.s32.totalorder %s119, %s120
      %p129 = scmp.eq.s32.totalorder %s25, 0
      %p130 = por %p128, %p129
      %p131 = scmp.ne.s32.totalorder %s119, %s120
      %p132 = scmp.eq.s32.totalorder %s26, 1
      %p133 = por %p131, %p132
      %p135 = scmp.ne.s32.totalorder %s120, %s134
      %p136 = scmp.eq.s32.totalorder %s26, 0
      %p137 = por %p135, %p136
      %s139 = sadd.s32 %s138, 1
      %p142 = scmp.eq.s32.totalorder %s20, 1
      %p143 = scmp.ne.s32.totalorder %s138, %s140
      %p144 = scmp.eq.s32.totalorder %s20, 0
      %p145 = por %p143, %p144
      %p146 = scmp.ne.s32.totalorder %s138, %s140
      %p147 = scmp.eq.s32.totalorder %s25, 1
      %p148 = por %p146, %p147
      %p149 = scmp.ne.s32.totalorder %s140, %s141
      %p150 = scmp.eq.s32.totalorder %s25, 0
      %p151 = por %p149, %p150
      %p152 = scmp.ne.s32.totalorder %s140, %s141
      %p153 = scmp.eq.s32.totalorder %s26, 1
      %p154 = por %p152, %p153
      %p156 = scmp.ne.s32.totalorder %s141, %s155
      %p157 = scmp.eq.s32.totalorder %s26, 0
      %p158 = por %p156, %p157
      %s159 = ssub.s32 %s20, %s27
      %p160 = scmp.eq.s32.totalorder %s159, 0
      %s162 = sadd.s32 %s161, 1
      %s163 = scalar_select %p160, %s161, %s162
      %p166 = pneg %p160
      %p167 = scmp.eq.s32.totalorder %s20, 1
      %p168 = por %p166, %p167
      %p169 = scmp.ne.s32.totalorder %s161, %s164
      %p170 = scmp.eq.s32.totalorder %s20, 0
      %p171 = por %p169, %p170
      %p172 = scmp.ne.s32.totalorder %s161, %s164
      %p173 = scmp.eq.s32.totalorder %s25, 1
      %p174 = por %p172, %p173
      %p175 = scmp.ne.s32.totalorder %s164, %s165
      %p176 = scmp.eq.s32.totalorder %s25, 0
      %p177 = por %p175, %p176
      %p178 = scmp.ne.s32.totalorder %s164, %s165
      %p179 = scmp.eq.s32.totalorder %s26, 1
      %p180 = por %p178, %p179
      %p182 = scmp.ne.s32.totalorder %s165, %s181
      %p183 = scmp.eq.s32.totalorder %s26, 0
      %p184 = por %p182, %p183
      %p185 = scmp.le.s32.totalorder 1, %s20
      %p186 = scmp.lt.s32.totalorder %s20, 3
      %p187 = pnand %p185, %p186
      %p188 = pneg %p187
      // Predicated region
      $region9: #{tpu_custom_call.1} parent=5 // pred_check
        _
      $region10: #{tpu_custom_call.1} parent=5 // pred_check_branch
        %190 = sbr.rel (%p187) target = $region12
      $region11: #{tpu_custom_call.1} parent=5 // pred_region
        %s191 = ssub.s32 %s20, 1
        // Predicated region
        $region13: #{tpu_custom_call.1} parent=11 // pred_check
          %p192 = pneg %p67
        $region14: #{tpu_custom_call.1} parent=11 // pred_check_branch
          %194 = sbr.rel (%p192) target = $region16
        $region15: #{tpu_custom_call.1} parent=11 // pred_region
          _
        $region16: #{tpu_custom_call.1} parent=11 // pred_fallthru
          _
        // Predicated region
        $region17: #{tpu_custom_call.1} parent=11 // pred_check
          %p195 = pneg %p88
        $region18: #{tpu_custom_call.1} parent=11 // pred_check_branch
          %197 = sbr.rel (%p195) target = $region20
        $region19: #{tpu_custom_call.1} parent=11 // pred_region
          _
        $region20: #{tpu_custom_call.1} parent=11 // pred_fallthru
          _
        // Predicated region
        $region21: #{tpu_custom_call.1} parent=11 // pred_check
          %p198 = pneg %p109
        $region22: #{tpu_custom_call.1} parent=11 // pred_check_branch
          %200 = sbr.rel (%p198) target = $region24
        $region23: #{tpu_custom_call.1} parent=11 // pred_region
          _
        $region24: #{tpu_custom_call.1} parent=11 // pred_fallthru
          _
        // Predicated region
        $region25: #{tpu_custom_call.1} parent=11 // pred_check
          %p201 = pneg %p130
        $region26: #{tpu_custom_call.1} parent=11 // pred_check_branch
          %203 = sbr.rel (%p201) target = $region28
        $region27: #{tpu_custom_call.1} parent=11 // pred_region
          %s205 = ssub.s32 256, 256
          %206 = vsyncadd [#allocation6], %s205
          %s207 = sshll.u32 [#allocation5], 4
          %s208 = int_to_ptr.vmem [resolvable:$true] %s207
          %213 = dma.hbm_to_vmem [thread:$0]  %s5, 256, %s208, [#allocation6], 128, 128, 8
        $region28: #{tpu_custom_call.1} parent=11 // pred_fallthru
          _
        // Predicated region
        $region29: #{tpu_custom_call.1} parent=11 // pred_check
          %p214 = pneg %p151
        $region30: #{tpu_custom_call.1} parent=11 // pred_check_branch
          %216 = sbr.rel (%p214) target = $region32
        $region31: #{tpu_custom_call.1} parent=11 // pred_region
          _
        $region32: #{tpu_custom_call.1} parent=11 // pred_fallthru
          _
      $region12: #{tpu_custom_call.1} parent=5 // pred_fallthru
        _
      %p217 = scmp.lt.s32.totalorder %s20, 2
      // Predicated region
      $region33: #{tpu_custom_call.1} parent=5 // pred_check
        %p218 = pneg %p217
      $region34: #{tpu_custom_call.1} parent=5 // pred_check_branch
        %220 = sbr.rel (%p218) target = $region36
      $region35: #{tpu_custom_call.1} parent=5 // pred_region
        // Predicated region
        $region37: #{tpu_custom_call.1} parent=35 // pred_check
          %p221 = pneg %p40
        $region38: #{tpu_custom_call.1} parent=35 // pred_check_branch
          %223 = sbr.rel (%p221) target = $region40
        $region39: #{tpu_custom_call.1} parent=35 // pred_region
          %s224 = smul.u32 8, %s20
          %p225 = scmp.lt.s32.totalorder %s224, 15
          %s226 = scalar_select %p225, %s224, 15
          %s227 = smul.addr %s226, 8
          %s228 = scalar_lea.vmem %s1, %s227
          %s229 = smul.u32 8, %s20
        $region40: #{tpu_custom_call.1} parent=35 // pred_fallthru
          _
      $region36: #{tpu_custom_call.1} parent=5 // pred_fallthru
        _
      %p230 = scmp.le.s32.totalorder 1, %s20
      %p231 = scmp.lt.s32.totalorder %s20, 3
      %p232 = pnand %p230, %p231
      %p233 = pneg %p232
      // Predicated region
      $region41: #{tpu_custom_call.1} parent=5 // pred_check
        _
      $region42: #{tpu_custom_call.1} parent=5 // pred_check_branch
        %235 = sbr.rel (%p232) target = $region44
      $region43: #{tpu_custom_call.1} parent=5 // pred_region
        %s236 = ssub.s32 %s20, 1
        // Predicated region
        $region45: #{tpu_custom_call.1} parent=43 // pred_check
          %p237 = pneg %p130
        $region46: #{tpu_custom_call.1} parent=43 // pred_check_branch
          %239 = sbr.rel (%p237) target = $region48
        $region47: #{tpu_custom_call.1} parent=43 // pred_region
          %240 = dma.done [#allocation6], 256
        $region48: #{tpu_custom_call.1} parent=43 // pred_fallthru
          _
        %s241 = smul.u32 8, %s25
        %p242 = scmp.lt.s32.totalorder %s241, 15
        %s243 = scalar_select %p242, %s241, 15
        %s244 = smul.addr %s243, 8
        %s245 = scalar_lea.vmem %s1, %s244
        %p246 = pneg %p46
        %p247 = pneg %p43
        %p248 = pneg %p67
        %p249 = pneg %p64
        %p250 = pneg %p88
        %p251 = pneg %p85
        %p252 = pneg %p109
        %p253 = pneg %p106
        %p254 = pneg %p130
        %p255 = pneg %p127
        %p256 = pneg %p151
        %p257 = pneg %p148
        %p258 = pneg %p177
        %p259 = pneg %p174
        %s260 = smul.u32 8, %s25
        %p261 = scmp.lt.s32.totalorder %s260, 15
        %s262 = scalar_select %p261, %s260, 15
        %s263 = smul.addr %s262, 8
        %s264 = scalar_lea.vmem %s7, %s263
        %s265 = smul.u32 8, %s25
        %p266 = scmp.lt.s32.totalorder %s265, 15
        %s267 = scalar_select %p266, %s265, 15
        %s268 = smul.addr %s267, 8
        %s269 = scalar_lea.vmem %s1, %s268
        %s270 = smul.u32 8, %s25
        %s271 = smul.u32 8, %s25
        %p272 = scmp.lt.s32.totalorder %s271, 15
        %s273 = scalar_select %p272, %s271, 15
        %s274 = smul.addr %s273, 8
        %s275 = scalar_lea.vmem %s7, %s274
        %s276 = smul.u32 8, %s25
        %v277 = vld [vmem:[%s269] sm:$0xff]
        %v278 = vld [vmem:[%s269 + $0x8] sm:$0xff]
        %v279 = vld [vmem:[%s269 + $0x10] sm:$0xff]
        %v280 = vld [vmem:[%s269 + $0x18] sm:$0xff]
        %v281 = vld [vmem:[%s269 + $0x20] sm:$0xff]
        %v282 = vld [vmem:[%s269 + $0x28] sm:$0xff]
        %v283 = vld [vmem:[%s269 + $0x30] sm:$0xff]
        %v284 = vld [vmem:[%s269 + $0x38] sm:$0xff]
        %v285 = vld [vmem:[%s2] sm:$0xff]
        %v286 = vld [vmem:[%s2 + $0x8] sm:$0xff]
        %v287 = vld [vmem:[%s3] sm:$0x1]
        %v289 = vlaneseq
        %v290 = vshrl.u32 %v289, 7
        %v291 = vsub.s32 0, %v290
        %v292 = vrot.slane %v287, %v291
        %vm294 = vcmask 130048
        %v296 = vsel %vm294, %v277, 0
        %v299 = vsel %vm294, %v278, 0
        %v302 = vsel %vm294, %v279, 0
        %v305 = vsel %vm294, %v280, 0
        %v308 = vsel %vm294, %v281, 0
        %v311 = vsel %vm294, %v282, 0
        %v314 = vsel %vm294, %v283, 0
        %v317 = vsel %vm294, %v284, 0
        %319 = vmatprep.subr.mxu0 0.0
        %320 = vmatpush1.msra.mxu0 0.0
        %321 = vmatprep.subr.mxu0 0.0
        %322 = vmatpush1.msra.mxu0 0.0
        %323 = vmatprep.subr.mxu0 0.0
        %324 = vmatpush1.msra.mxu0 0.0
        %325 = vmatprep.subr.mxu0 0.0
        %326 = vmatpush1.msra.mxu0 0.0
        %327 = vmatprep.subr.mxu0 0.0
        %328 = vmatpush1.msra.mxu0 0.0
        %329 = vmatprep.subr.mxu0 0.0
        %330 = vmatpush1.msra.mxu0 0.0
        %331 = vmatprep.subr.mxu0 0.0
        %332 = vmatpush1.msra.mxu0 0.0
        %333 = vmatprep.subr.mxu0 0.0
        %334 = vmatpush1.msra.mxu0 0.0
        %335 = vmatprep.subr.mxu0 0.0
        %336 = vmatpush1.msra.mxu0 0.0
        %337 = vmatprep.subr.mxu0 0.0
        %338 = vmatpush1.msra.mxu0 0.0
        %339 = vmatprep.subr.mxu0 0.0
        %340 = vmatpush1.msra.mxu0 0.0
        %341 = vmatprep.subr.mxu0 0.0
        %342 = vmatpush1.msra.mxu0 0.0
        %343 = vmatprep.subr.mxu0 0.0
        %344 = vmatpush1.msra.mxu0 0.0
        %345 = vmatprep.subr.mxu0 0.0
        %346 = vmatpush1.msra.mxu0 0.0
        %347 = vmatprep.subr.mxu0 0.0
        %348 = vmatpush1.msra.mxu0 %v286
        %349 = vmatprep.subr.mxu0 0.0
        %350 = vmatpush1.msra.mxu0 %v285
        %351 = vmatprep.subr.mxu0 0.0
        %352 = vmatpush2.msra.mxu0 0.0
        %353 = vmatprep.subr.mxu0 0.0
        %354 = vmatpush2.msra.mxu0 0.0
        %355 = vmatprep.subr.mxu0 0.0
        %356 = vmatpush2.msra.mxu0 0.0
        %357 = vmatprep.subr.mxu0 0.0
        %358 = vmatpush2.msra.mxu0 0.0
        %359 = vmatprep.subr.mxu0 0.0
        %360 = vmatpush2.msra.mxu0 0.0
        %361 = vmatprep.subr.mxu0 0.0
        %362 = vmatpush2.msra.mxu0 0.0
        %363 = vmatprep.subr.mxu0 0.0
        %364 = vmatpush2.msra.mxu0 0.0
        %365 = vmatprep.subr.mxu0 0.0
        %366 = vmatpush2.msra.mxu0 0.0
        %367 = vmatprep.subr.mxu0 0.0
        %368 = vmatpush2.msra.mxu0 0.0
        %369 = vmatprep.subr.mxu0 0.0
        %370 = vmatpush2.msra.mxu0 0.0
        %371 = vmatprep.subr.mxu0 0.0
        %372 = vmatpush2.msra.mxu0 0.0
        %373 = vmatprep.subr.mxu0 0.0
        %374 = vmatpush2.msra.mxu0 0.0
        %375 = vmatprep.subr.mxu0 0.0
        %376 = vmatpush2.msra.mxu0 0.0
        %377 = vmatprep.subr.mxu0 0.0
        %378 = vmatpush2.msra.mxu0 0.0
        %379 = vmatprep.subr.mxu0 0.0
        %380 = vmatpush2.msra.mxu0 0.0
        %381 = vmatprep.subr.mxu0 0.0
        %382 = vmatpush2.msra.mxu0 0.0
        %383 = vmatprep.mubr.f32.mxu0 0.0
        %384 = vmatmul.mubr.f32.gmra.mxu0 %v296
        %v385 = vpop.f32.mrf.mxu0
        %v386 = vadd.f32 %v292, %v385
        %v387 = vpop.f32.mrf.mxu0
        %388 = vmatprep.mubr.f32.mxu0 0.0
        %389 = vmatmul.mubr.f32.gmra.mxu0 %v299
        %v390 = vpop.f32.mrf.mxu0
        %v391 = vadd.f32 %v292, %v390
        %v392 = vpop.f32.mrf.mxu0
        %393 = vmatprep.mubr.f32.mxu0 0.0
        %394 = vmatmul.mubr.f32.gmra.mxu0 %v302
        %v395 = vpop.f32.mrf.mxu0
        %v396 = vadd.f32 %v292, %v395
        %v397 = vpop.f32.mrf.mxu0
        %398 = vmatprep.mubr.f32.mxu0 0.0
        %399 = vmatmul.mubr.f32.gmra.mxu0 %v305
        %v400 = vpop.f32.mrf.mxu0
        %v401 = vadd.f32 %v292, %v400
        %v402 = vpop.f32.mrf.mxu0
        %403 = vmatprep.mubr.f32.mxu0 0.0
        %404 = vmatmul.mubr.f32.gmra.mxu0 %v308
        %v405 = vpop.f32.mrf.mxu0
        %v406 = vadd.f32 %v292, %v405
        %v407 = vpop.f32.mrf.mxu0
        %408 = vmatprep.mubr.f32.mxu0 0.0
        %409 = vmatmul.mubr.f32.gmra.mxu0 %v311
        %v410 = vpop.f32.mrf.mxu0
        %v411 = vadd.f32 %v292, %v410
        %v412 = vpop.f32.mrf.mxu0
        %413 = vmatprep.mubr.f32.mxu0 0.0
        %414 = vmatmul.mubr.f32.gmra.mxu0 %v314
        %v415 = vpop.f32.mrf.mxu0
        %v416 = vadd.f32 %v292, %v415
        %v417 = vpop.f32.mrf.mxu0
        %418 = vmatprep.mubr.f32.mxu0 0.0
        %419 = vmatmul.mubr.f32.gmra.mxu0 %v317
        %v420 = vpop.f32.mrf.mxu0
        %v421 = vadd.f32 %v292, %v420
        %v422 = vpop.f32.mrf.mxu0
        %423 = vdwg.mxu0
        %s424 = smul.u32 %s25, 4
        %s425 = sld [smem:[#allocation4 + %s424]]
        %s426 = smul.u32 %s425, 32
        %s427 = scalar_lea.vmem %s4, %s426
        %v428 = vld [vmem:[%s427] sm:$0xff]
        %v429 = vld [vmem:[%s427 + $0x8] sm:$0xff]
        %v430 = vld [vmem:[%s427 + $0x10] sm:$0xff]
        %v431 = vld [vmem:[%s427 + $0x18] sm:$0xff]
        %s432 = sadd.s32 %s424, 1
        %s433 = sld [smem:[#allocation4 + %s432]]
        %s434 = smul.u32 %s433, 32
        %s435 = scalar_lea.vmem %s4, %s434
        %v436 = vld [vmem:[%s435] sm:$0xff]
        %v437 = vld [vmem:[%s435 + $0x8] sm:$0xff]
        %v438 = vld [vmem:[%s435 + $0x10] sm:$0xff]
        %v439 = vld [vmem:[%s435 + $0x18] sm:$0xff]
        %s440 = sadd.s32 %s424, 2
        %s441 = sld [smem:[#allocation4 + %s440]]
        %s442 = smul.u32 %s441, 32
        %s443 = scalar_lea.vmem %s4, %s442
        %v444 = vld [vmem:[%s443] sm:$0xff]
        %v445 = vld [vmem:[%s443 + $0x8] sm:$0xff]
        %v446 = vld [vmem:[%s443 + $0x10] sm:$0xff]
        %v447 = vld [vmem:[%s443 + $0x18] sm:$0xff]
        %s448 = sadd.s32 %s424, 3
        %s449 = sld [smem:[#allocation4 + %s448]]
        %s450 = smul.u32 %s449, 32
        %s451 = scalar_lea.vmem %s4, %s450
        %v452 = vld [vmem:[%s451] sm:$0xff]
        %v453 = vld [vmem:[%s451 + $0x8] sm:$0xff]
        %v454 = vld [vmem:[%s451 + $0x10] sm:$0xff]
        %v455 = vld [vmem:[%s451 + $0x18] sm:$0xff]
        %458 = vrot.lane.b32.xlu0 %v386, 112
        %v459 = vpop.permute.xlu0 %458
        %460 = vrot.lane.b32.xlu0 %v391, 112
        %v461 = vpop.permute.xlu0 %460
        %vm462 = vcmask 64512
        %v463 = vsel %vm462, %v386, 0
        %v465 = vsel %vm462, %v391, 0
        %v467 = vsel %vm462, %v459, 0
        %v469 = vsel %vm462, %v461, 0
        %471 = vmatprep.subr.mxu0 0.0
        %472 = vmatpush1.xpose.msra.mxu0 0.0
        %473 = vmatprep.subr.mxu0 0.0
        %474 = vmatpush1.xpose.msra.mxu0 0.0
        %475 = vmatprep.subr.mxu0 0.0
        %476 = vmatpush1.xpose.msra.mxu0 0.0
        %477 = vmatprep.subr.mxu0 0.0
        %478 = vmatpush1.xpose.msra.mxu0 0.0
        %479 = vmatprep.subr.mxu0 0.0
        %480 = vmatpush1.xpose.msra.mxu0 0.0
        %481 = vmatprep.subr.mxu0 0.0
        %482 = vmatpush1.xpose.msra.mxu0 0.0
        %483 = vmatprep.subr.mxu0 0.0
        %484 = vmatpush1.xpose.msra.mxu0 0.0
        %485 = vmatprep.subr.mxu0 0.0
        %486 = vmatpush1.xpose.msra.mxu0 0.0
        %487 = vmatprep.subr.mxu0 0.0
        %488 = vmatpush1.xpose.msra.mxu0 0.0
        %489 = vmatprep.subr.mxu0 0.0
        %490 = vmatpush1.xpose.msra.mxu0 0.0
        %491 = vmatprep.subr.mxu0 0.0
        %492 = vmatpush1.xpose.msra.mxu0 0.0
        %493 = vmatprep.subr.mxu0 0.0
        %494 = vmatpush1.xpose.msra.mxu0 0.0
        %495 = vmatprep.subr.mxu0 0.0
        %496 = vmatpush1.xpose.msra.mxu0 0.0
        %497 = vmatprep.subr.mxu0 0.0
        %498 = vmatpush1.xpose.msra.mxu0 0.0
        %499 = vmatprep.subr.mxu0 0.0
        %500 = vmatpush1.xpose.msra.mxu0 %v469
        %501 = vmatprep.subr.mxu0 0.0
        %502 = vmatpush1.xpose.msra.mxu0 %v467
        %503 = vmatprep.subr.mxu0 0.0
        %504 = vmatpush2.xpose.msra.mxu0 0.0
        %505 = vmatprep.subr.mxu0 0.0
        %506 = vmatpush2.xpose.msra.mxu0 0.0
        %507 = vmatprep.subr.mxu0 0.0
        %508 = vmatpush2.xpose.msra.mxu0 0.0
        %509 = vmatprep.subr.mxu0 0.0
        %510 = vmatpush2.xpose.msra.mxu0 0.0
        %511 = vmatprep.subr.mxu0 0.0
        %512 = vmatpush2.xpose.msra.mxu0 0.0
        %513 = vmatprep.subr.mxu0 0.0
        %514 = vmatpush2.xpose.msra.mxu0 0.0
        %515 = vmatprep.subr.mxu0 0.0
        %516 = vmatpush2.xpose.msra.mxu0 0.0
        %517 = vmatprep.subr.mxu0 0.0
        %518 = vmatpush2.xpose.msra.mxu0 0.0
        %519 = vmatprep.subr.mxu0 0.0
        %520 = vmatpush2.xpose.msra.mxu0 0.0
        %521 = vmatprep.subr.mxu0 0.0
        %522 = vmatpush2.xpose.msra.mxu0 0.0
        %523 = vmatprep.subr.mxu0 0.0
        %524 = vmatpush2.xpose.msra.mxu0 0.0
        %525 = vmatprep.subr.mxu0 0.0
        %526 = vmatpush2.xpose.msra.mxu0 0.0
        %527 = vmatprep.subr.mxu0 0.0
        %528 = vmatpush2.xpose.msra.mxu0 0.0
        %529 = vmatprep.subr.mxu0 0.0
        %530 = vmatpush2.xpose.msra.mxu0 0.0
        %531 = vmatprep.subr.mxu0 0.0
        %532 = vmatpush2.xpose.msra.mxu0 0.0
        %533 = vmatprep.subr.mxu0 0.0
        %534 = vmatpush2.xpose.msra.mxu0 0.0
        %535 = vmatprep.mubr.f32.mxu0 0.0
        %536 = vmatmul.mubr.f32.gmra.mxu0 %v463
        %v537 = vpop.f32.mrf.mxu0
        %v538 = vadd.f32 %v428, %v537
        %v539 = vpop.f32.mrf.mxu0
        %540 = vmatprep.mubr.f32.mxu0 0.0
        %541 = vmatmul.mubr.f32.gmra.mxu0 %v465
        %v542 = vpop.f32.mrf.mxu0
        %v543 = vadd.f32 %v429, %v542
        %v544 = vpop.f32.mrf.mxu0
        %545 = vdwg.mxu0
        %548 = vrot.lane.b32.xlu0 %v396, 112
        %v549 = vpop.permute.xlu0 %548
        %550 = vrot.lane.b32.xlu0 %v401, 112
        %v551 = vpop.permute.xlu0 %550
        %v552 = vsel %vm462, %v396, 0
        %v554 = vsel %vm462, %v401, 0
        %v556 = vsel %vm462, %v549, 0
        %v558 = vsel %vm462, %v551, 0
        %560 = vmatprep.subr.mxu0 0.0
        %561 = vmatpush1.xpose.msra.mxu0 0.0
        %562 = vmatprep.subr.mxu0 0.0
        %563 = vmatpush1.xpose.msra.mxu0 0.0
        %564 = vmatprep.subr.mxu0 0.0
        %565 = vmatpush1.xpose.msra.mxu0 0.0
        %566 = vmatprep.subr.mxu0 0.0
        %567 = vmatpush1.xpose.msra.mxu0 0.0
        %568 = vmatprep.subr.mxu0 0.0
        %569 = vmatpush1.xpose.msra.mxu0 0.0
        %570 = vmatprep.subr.mxu0 0.0
        %571 = vmatpush1.xpose.msra.mxu0 0.0
        %572 = vmatprep.subr.mxu0 0.0
        %573 = vmatpush1.xpose.msra.mxu0 0.0
        %574 = vmatprep.subr.mxu0 0.0
        %575 = vmatpush1.xpose.msra.mxu0 0.0
        %576 = vmatprep.subr.mxu0 0.0
        %577 = vmatpush1.xpose.msra.mxu0 0.0
        %578 = vmatprep.subr.mxu0 0.0
        %579 = vmatpush1.xpose.msra.mxu0 0.0
        %580 = vmatprep.subr.mxu0 0.0
        %581 = vmatpush1.xpose.msra.mxu0 0.0
        %582 = vmatprep.subr.mxu0 0.0
        %583 = vmatpush1.xpose.msra.mxu0 0.0
        %584 = vmatprep.subr.mxu0 0.0
        %585 = vmatpush1.xpose.msra.mxu0 0.0
        %586 = vmatprep.subr.mxu0 0.0
        %587 = vmatpush1.xpose.msra.mxu0 0.0
        %588 = vmatprep.subr.mxu0 0.0
        %589 = vmatpush1.xpose.msra.mxu0 %v558
        %590 = vmatprep.subr.mxu0 0.0
        %591 = vmatpush1.xpose.msra.mxu0 %v556
        %592 = vmatprep.subr.mxu0 0.0
        %593 = vmatpush2.xpose.msra.mxu0 0.0
        %594 = vmatprep.subr.mxu0 0.0
        %595 = vmatpush2.xpose.msra.mxu0 0.0
        %596 = vmatprep.subr.mxu0 0.0
        %597 = vmatpush2.xpose.msra.mxu0 0.0
        %598 = vmatprep.subr.mxu0 0.0
        %599 = vmatpush2.xpose.msra.mxu0 0.0
        %600 = vmatprep.subr.mxu0 0.0
        %601 = vmatpush2.xpose.msra.mxu0 0.0
        %602 = vmatprep.subr.mxu0 0.0
        %603 = vmatpush2.xpose.msra.mxu0 0.0
        %604 = vmatprep.subr.mxu0 0.0
        %605 = vmatpush2.xpose.msra.mxu0 0.0
        %606 = vmatprep.subr.mxu0 0.0
        %607 = vmatpush2.xpose.msra.mxu0 0.0
        %608 = vmatprep.subr.mxu0 0.0
        %609 = vmatpush2.xpose.msra.mxu0 0.0
        %610 = vmatprep.subr.mxu0 0.0
        %611 = vmatpush2.xpose.msra.mxu0 0.0
        %612 = vmatprep.subr.mxu0 0.0
        %613 = vmatpush2.xpose.msra.mxu0 0.0
        %614 = vmatprep.subr.mxu0 0.0
        %615 = vmatpush2.xpose.msra.mxu0 0.0
        %616 = vmatprep.subr.mxu0 0.0
        %617 = vmatpush2.xpose.msra.mxu0 0.0
        %618 = vmatprep.subr.mxu0 0.0
        %619 = vmatpush2.xpose.msra.mxu0 0.0
        %620 = vmatprep.subr.mxu0 0.0
        %621 = vmatpush2.xpose.msra.mxu0 0.0
        %622 = vmatprep.subr.mxu0 0.0
        %623 = vmatpush2.xpose.msra.mxu0 0.0
        %624 = vmatprep.mubr.f32.mxu0 0.0
        %625 = vmatmul.mubr.f32.gmra.mxu0 %v552
        %v626 = vpop.f32.mrf.mxu0
        %v627 = vadd.f32 %v436, %v626
        %v628 = vpop.f32.mrf.mxu0
        %629 = vmatprep.mubr.f32.mxu0 0.0
        %630 = vmatmul.mubr.f32.gmra.mxu0 %v554
        %v631 = vpop.f32.mrf.mxu0
        %v632 = vadd.f32 %v437, %v631
        %v633 = vpop.f32.mrf.mxu0
        %634 = vdwg.mxu0
        %637 = vrot.lane.b32.xlu0 %v406, 112
        %v638 = vpop.permute.xlu0 %637
        %639 = vrot.lane.b32.xlu0 %v411, 112
        %v640 = vpop.permute.xlu0 %639
        %v641 = vsel %vm462, %v406, 0
        %v643 = vsel %vm462, %v411, 0
        %v645 = vsel %vm462, %v638, 0
        %v647 = vsel %vm462, %v640, 0
        %649 = vmatprep.subr.mxu0 0.0
        %650 = vmatpush1.xpose.msra.mxu0 0.0
        %651 = vmatprep.subr.mxu0 0.0
        %652 = vmatpush1.xpose.msra.mxu0 0.0
        %653 = vmatprep.subr.mxu0 0.0
        %654 = vmatpush1.xpose.msra.mxu0 0.0
        %655 = vmatprep.subr.mxu0 0.0
        %656 = vmatpush1.xpose.msra.mxu0 0.0
        %657 = vmatprep.subr.mxu0 0.0
        %658 = vmatpush1.xpose.msra.mxu0 0.0
        %659 = vmatprep.subr.mxu0 0.0
        %660 = vmatpush1.xpose.msra.mxu0 0.0
        %661 = vmatprep.subr.mxu0 0.0
        %662 = vmatpush1.xpose.msra.mxu0 0.0
        %663 = vmatprep.subr.mxu0 0.0
        %664 = vmatpush1.xpose.msra.mxu0 0.0
        %665 = vmatprep.subr.mxu0 0.0
        %666 = vmatpush1.xpose.msra.mxu0 0.0
        %667 = vmatprep.subr.mxu0 0.0
        %668 = vmatpush1.xpose.msra.mxu0 0.0
        %669 = vmatprep.subr.mxu0 0.0
        %670 = vmatpush1.xpose.msra.mxu0 0.0
        %671 = vmatprep.subr.mxu0 0.0
        %672 = vmatpush1.xpose.msra.mxu0 0.0
        %673 = vmatprep.subr.mxu0 0.0
        %674 = vmatpush1.xpose.msra.mxu0 0.0
        %675 = vmatprep.subr.mxu0 0.0
        %676 = vmatpush1.xpose.msra.mxu0 0.0
        %677 = vmatprep.subr.mxu0 0.0
        %678 = vmatpush1.xpose.msra.mxu0 %v647
        %679 = vmatprep.subr.mxu0 0.0
        %680 = vmatpush1.xpose.msra.mxu0 %v645
        %681 = vmatprep.subr.mxu0 0.0
        %682 = vmatpush2.xpose.msra.mxu0 0.0
        %683 = vmatprep.subr.mxu0 0.0
        %684 = vmatpush2.xpose.msra.mxu0 0.0
        %685 = vmatprep.subr.mxu0 0.0
        %686 = vmatpush2.xpose.msra.mxu0 0.0
        %687 = vmatprep.subr.mxu0 0.0
        %688 = vmatpush2.xpose.msra.mxu0 0.0
        %689 = vmatprep.subr.mxu0 0.0
        %690 = vmatpush2.xpose.msra.mxu0 0.0
        %691 = vmatprep.subr.mxu0 0.0
        %692 = vmatpush2.xpose.msra.mxu0 0.0
        %693 = vmatprep.subr.mxu0 0.0
        %694 = vmatpush2.xpose.msra.mxu0 0.0
        %695 = vmatprep.subr.mxu0 0.0
        %696 = vmatpush2.xpose.msra.mxu0 0.0
        %697 = vmatprep.subr.mxu0 0.0
        %698 = vmatpush2.xpose.msra.mxu0 0.0
        %699 = vmatprep.subr.mxu0 0.0
        %700 = vmatpush2.xpose.msra.mxu0 0.0
        %701 = vmatprep.subr.mxu0 0.0
        %702 = vmatpush2.xpose.msra.mxu0 0.0
        %703 = vmatprep.subr.mxu0 0.0
        %704 = vmatpush2.xpose.msra.mxu0 0.0
        %705 = vmatprep.subr.mxu0 0.0
        %706 = vmatpush2.xpose.msra.mxu0 0.0
        %707 = vmatprep.subr.mxu0 0.0
        %708 = vmatpush2.xpose.msra.mxu0 0.0
        %709 = vmatprep.subr.mxu0 0.0
        %710 = vmatpush2.xpose.msra.mxu0 0.0
        %711 = vmatprep.subr.mxu0 0.0
        %712 = vmatpush2.xpose.msra.mxu0 0.0
        %713 = vmatprep.mubr.f32.mxu0 0.0
        %714 = vmatmul.mubr.f32.gmra.mxu0 %v641
        %v715 = vpop.f32.mrf.mxu0
        %v716 = vadd.f32 %v444, %v715
        %v717 = vpop.f32.mrf.mxu0
        %718 = vmatprep.mubr.f32.mxu0 0.0
        %719 = vmatmul.mubr.f32.gmra.mxu0 %v643
        %v720 = vpop.f32.mrf.mxu0
        %v721 = vadd.f32 %v445, %v720
        %v722 = vpop.f32.mrf.mxu0
        %723 = vdwg.mxu0
        %726 = vrot.lane.b32.xlu0 %v416, 112
        %v727 = vpop.permute.xlu0 %726
        %728 = vrot.lane.b32.xlu0 %v421, 112
        %v729 = vpop.permute.xlu0 %728
        %v730 = vsel %vm462, %v416, 0
        %v732 = vsel %vm462, %v421, 0
        %v734 = vsel %vm462, %v727, 0
        %v736 = vsel %vm462, %v729, 0
        %738 = vmatprep.subr.mxu0 0.0
        %739 = vmatpush1.xpose.msra.mxu0 0.0
        %740 = vmatprep.subr.mxu0 0.0
        %741 = vmatpush1.xpose.msra.mxu0 0.0
        %742 = vmatprep.subr.mxu0 0.0
        %743 = vmatpush1.xpose.msra.mxu0 0.0
        %744 = vmatprep.subr.mxu0 0.0
        %745 = vmatpush1.xpose.msra.mxu0 0.0
        %746 = vmatprep.subr.mxu0 0.0
        %747 = vmatpush1.xpose.msra.mxu0 0.0
        %748 = vmatprep.subr.mxu0 0.0
        %749 = vmatpush1.xpose.msra.mxu0 0.0
        %750 = vmatprep.subr.mxu0 0.0
        %751 = vmatpush1.xpose.msra.mxu0 0.0
        %752 = vmatprep.subr.mxu0 0.0
        %753 = vmatpush1.xpose.msra.mxu0 0.0
        %754 = vmatprep.subr.mxu0 0.0
        %755 = vmatpush1.xpose.msra.mxu0 0.0
        %756 = vmatprep.subr.mxu0 0.0
        %757 = vmatpush1.xpose.msra.mxu0 0.0
        %758 = vmatprep.subr.mxu0 0.0
        %759 = vmatpush1.xpose.msra.mxu0 0.0
        %760 = vmatprep.subr.mxu0 0.0
        %761 = vmatpush1.xpose.msra.mxu0 0.0
        %762 = vmatprep.subr.mxu0 0.0
        %763 = vmatpush1.xpose.msra.mxu0 0.0
        %764 = vmatprep.subr.mxu0 0.0
        %765 = vmatpush1.xpose.msra.mxu0 0.0
        %766 = vmatprep.subr.mxu0 0.0
        %767 = vmatpush1.xpose.msra.mxu0 %v736
        %768 = vmatprep.subr.mxu0 0.0
        %769 = vmatpush1.xpose.msra.mxu0 %v734
        %770 = vmatprep.subr.mxu0 0.0
        %771 = vmatpush2.xpose.msra.mxu0 0.0
        %772 = vmatprep.subr.mxu0 0.0
        %773 = vmatpush2.xpose.msra.mxu0 0.0
        %774 = vmatprep.subr.mxu0 0.0
        %775 = vmatpush2.xpose.msra.mxu0 0.0
        %776 = vmatprep.subr.mxu0 0.0
        %777 = vmatpush2.xpose.msra.mxu0 0.0
        %778 = vmatprep.subr.mxu0 0.0
        %779 = vmatpush2.xpose.msra.mxu0 0.0
        %780 = vmatprep.subr.mxu0 0.0
        %781 = vmatpush2.xpose.msra.mxu0 0.0
        %782 = vmatprep.subr.mxu0 0.0
        %783 = vmatpush2.xpose.msra.mxu0 0.0
        %784 = vmatprep.subr.mxu0 0.0
        %785 = vmatpush2.xpose.msra.mxu0 0.0
        %786 = vmatprep.subr.mxu0 0.0
        %787 = vmatpush2.xpose.msra.mxu0 0.0
        %788 = vmatprep.subr.mxu0 0.0
        %789 = vmatpush2.xpose.msra.mxu0 0.0
        %790 = vmatprep.subr.mxu0 0.0
        %791 = vmatpush2.xpose.msra.mxu0 0.0
        %792 = vmatprep.subr.mxu0 0.0
        %793 = vmatpush2.xpose.msra.mxu0 0.0
        %794 = vmatprep.subr.mxu0 0.0
        %795 = vmatpush2.xpose.msra.mxu0 0.0
        %796 = vmatprep.subr.mxu0 0.0
        %797 = vmatpush2.xpose.msra.mxu0 0.0
        %798 = vmatprep.subr.mxu0 0.0
        %799 = vmatpush2.xpose.msra.mxu0 0.0
        %800 = vmatprep.subr.mxu0 0.0
        %801 = vmatpush2.xpose.msra.mxu0 0.0
        %802 = vmatprep.mubr.f32.mxu0 0.0
        %803 = vmatmul.mubr.f32.gmra.mxu0 %v730
        %v804 = vpop.f32.mrf.mxu0
        %v805 = vadd.f32 %v452, %v804
        %v806 = vpop.f32.mrf.mxu0
        %807 = vmatprep.mubr.f32.mxu0 0.0
        %808 = vmatmul.mubr.f32.gmra.mxu0 %v732
        %v809 = vpop.f32.mrf.mxu0
        %v810 = vadd.f32 %v453, %v809
        %v811 = vpop.f32.mrf.mxu0
        %812 = vdwg.mxu0
        %v813 = vsel %vm294, %v538, -inf
        %814 = vmax.xlane.f32.xlu0 %v813
        %v815 = vpop.xlane.xlu0 %814
        %v816 = vsel %vm294, %v543, -inf
        %817 = vmax.xlane.f32.xlu0 %v816
        %v818 = vpop.xlane.xlu0 %817
        %v819 = vsel %vm294, %v627, -inf
        %820 = vmax.xlane.f32.xlu0 %v819
        %v821 = vpop.xlane.xlu0 %820
        %v822 = vsel %vm294, %v632, -inf
        %823 = vmax.xlane.f32.xlu0 %v822
        %v824 = vpop.xlane.xlu0 %823
        %v825 = vsel %vm294, %v716, -inf
        %826 = vmax.xlane.f32.xlu0 %v825
        %v827 = vpop.xlane.xlu0 %826
        %v828 = vsel %vm294, %v721, -inf
        %829 = vmax.xlane.f32.xlu0 %v828
        %v830 = vpop.xlane.xlu0 %829
        %v831 = vsel %vm294, %v805, -inf
        %832 = vmax.xlane.f32.xlu0 %v831
        %v833 = vpop.xlane.xlu0 %832
        %v834 = vsel %vm294, %v810, -inf
        %835 = vmax.xlane.f32.xlu0 %v834
        %v836 = vpop.xlane.xlu0 %835
        %v837 = vsub.f32 %v538, %v815
        %v838 = vsub.f32 %v543, %v818
        %v839 = vsub.f32 %v627, %v821
        %v840 = vsub.f32 %v632, %v824
        %v841 = vsub.f32 %v716, %v827
        %v842 = vsub.f32 %v721, %v830
        %v843 = vsub.f32 %v805, %v833
        %v844 = vsub.f32 %v810, %v836
        %v845 = vmul.f32 %v837, 1.442695
        %v846 = vpow.pop %v845
        %v847 = vmul.f32 %v838, 1.442695
        %v848 = vpow.pop %v847
        %v849 = vmul.f32 %v839, 1.442695
        %v850 = vpow.pop %v849
        %v851 = vmul.f32 %v840, 1.442695
        %v852 = vpow.pop %v851
        %v853 = vmul.f32 %v841, 1.442695
        %v854 = vpow.pop %v853
        %v855 = vmul.f32 %v842, 1.442695
        %v856 = vpow.pop %v855
        %v857 = vmul.f32 %v843, 1.442695
        %v858 = vpow.pop %v857
        %v859 = vmul.f32 %v844, 1.442695
        %v860 = vpow.pop %v859
        %v861 = vsel %vm294, %v846, 0.0
        %862 = vadd.xlane.f32.xlu0 %v861
        %v863 = vpop.xlane.xlu0 %862
        %v864 = vsel %vm294, %v848, 0.0
        %865 = vadd.xlane.f32.xlu0 %v864
        %v866 = vpop.xlane.xlu0 %865
        %v867 = vsel %vm294, %v850, 0.0
        %868 = vadd.xlane.f32.xlu0 %v867
        %v869 = vpop.xlane.xlu0 %868
        %v870 = vsel %vm294, %v852, 0.0
        %871 = vadd.xlane.f32.xlu0 %v870
        %v872 = vpop.xlane.xlu0 %871
        %v873 = vsel %vm294, %v854, 0.0
        %874 = vadd.xlane.f32.xlu0 %v873
        %v875 = vpop.xlane.xlu0 %874
        %v876 = vsel %vm294, %v856, 0.0
        %877 = vadd.xlane.f32.xlu0 %v876
        %v878 = vpop.xlane.xlu0 %877
        %v879 = vsel %vm294, %v858, 0.0
        %880 = vadd.xlane.f32.xlu0 %v879
        %v881 = vpop.xlane.xlu0 %880
        %v882 = vsel %vm294, %v860, 0.0
        %883 = vadd.xlane.f32.xlu0 %v882
        %v884 = vpop.xlane.xlu0 %883
        %v885 = vrcp.pop %v863
        %v886 = vmul.f32 %v846, %v885
        %v887 = vrcp.pop %v866
        %v888 = vmul.f32 %v848, %v887
        %v889 = vrcp.pop %v869
        %v890 = vmul.f32 %v850, %v889
        %v891 = vrcp.pop %v872
        %v892 = vmul.f32 %v852, %v891
        %v893 = vrcp.pop %v875
        %v894 = vmul.f32 %v854, %v893
        %v895 = vrcp.pop %v878
        %v896 = vmul.f32 %v856, %v895
        %v897 = vrcp.pop %v881
        %v898 = vmul.f32 %v858, %v897
        %v899 = vrcp.pop %v884
        %v900 = vmul.f32 %v860, %v899
        %901 = vrot.lane.b32.xlu0 %v386, 96
        %v902 = vpop.permute.xlu0 %901
        %903 = vrot.lane.b32.xlu0 %v391, 96
        %v904 = vpop.permute.xlu0 %903
        %v908 = vsel %vm294, %v886, 0
        %v911 = vsel %vm294, %v888, 0
        %913 = vmatprep.subr.mxu0 0.0
        %914 = vmatpush1.msra.mxu0 0.0
        %915 = vmatprep.subr.mxu0 0.0
        %916 = vmatpush1.msra.mxu0 0.0
        %917 = vmatprep.subr.mxu0 0.0
        %918 = vmatpush1.msra.mxu0 0.0
        %919 = vmatprep.subr.mxu0 0.0
        %920 = vmatpush1.msra.mxu0 0.0
        %921 = vmatprep.subr.mxu0 0.0
        %922 = vmatpush1.msra.mxu0 0.0
        %923 = vmatprep.subr.mxu0 0.0
        %924 = vmatpush1.msra.mxu0 0.0
        %925 = vmatprep.subr.mxu0 0.0
        %926 = vmatpush1.msra.mxu0 0.0
        %927 = vmatprep.subr.mxu0 0.0
        %928 = vmatpush1.msra.mxu0 0.0
        %929 = vmatprep.subr.mxu0 0.0
        %930 = vmatpush1.msra.mxu0 0.0
        %931 = vmatprep.subr.mxu0 0.0
        %932 = vmatpush1.msra.mxu0 0.0
        %933 = vmatprep.subr.mxu0 0.0
        %934 = vmatpush1.msra.mxu0 0.0
        %935 = vmatprep.subr.mxu0 0.0
        %936 = vmatpush1.msra.mxu0 0.0
        %937 = vmatprep.subr.mxu0 0.0
        %938 = vmatpush1.msra.mxu0 0.0
        %939 = vmatprep.subr.mxu0 0.0
        %940 = vmatpush1.msra.mxu0 0.0
        %941 = vmatprep.subr.mxu0 0.0
        %942 = vmatpush1.msra.mxu0 %v904
        %943 = vmatprep.subr.mxu0 0.0
        %944 = vmatpush1.msra.mxu0 %v902
        %945 = vmatprep.subr.mxu0 0.0
        %946 = vmatpush2.msra.mxu0 0.0
        %947 = vmatprep.subr.mxu0 0.0
        %948 = vmatpush2.msra.mxu0 0.0
        %949 = vmatprep.subr.mxu0 0.0
        %950 = vmatpush2.msra.mxu0 0.0
        %951 = vmatprep.subr.mxu0 0.0
        %952 = vmatpush2.msra.mxu0 0.0
        %953 = vmatprep.subr.mxu0 0.0
        %954 = vmatpush2.msra.mxu0 0.0
        %955 = vmatprep.subr.mxu0 0.0
        %956 = vmatpush2.msra.mxu0 0.0
        %957 = vmatprep.subr.mxu0 0.0
        %958 = vmatpush2.msra.mxu0 0.0
        %959 = vmatprep.subr.mxu0 0.0
        %960 = vmatpush2.msra.mxu0 0.0
        %961 = vmatprep.subr.mxu0 0.0
        %962 = vmatpush2.msra.mxu0 0.0
        %963 = vmatprep.subr.mxu0 0.0
        %964 = vmatpush2.msra.mxu0 0.0
        %965 = vmatprep.subr.mxu0 0.0
        %966 = vmatpush2.msra.mxu0 0.0
        %967 = vmatprep.subr.mxu0 0.0
        %968 = vmatpush2.msra.mxu0 0.0
        %969 = vmatprep.subr.mxu0 0.0
        %970 = vmatpush2.msra.mxu0 0.0
        %971 = vmatprep.subr.mxu0 0.0
        %972 = vmatpush2.msra.mxu0 0.0
        %973 = vmatprep.subr.mxu0 0.0
        %974 = vmatpush2.msra.mxu0 0.0
        %975 = vmatprep.subr.mxu0 0.0
        %976 = vmatpush2.msra.mxu0 0.0
        %977 = vmatprep.mubr.f32.mxu0 0.0
        %978 = vmatmul.mubr.f32.gmra.mxu0 %v908
        %v979 = vpop.f32.mrf.mxu0
        %v980 = vadd.f32 0.0, %v979
        %v981 = vpop.f32.mrf.mxu0
        %982 = vmatprep.mubr.f32.mxu0 0.0
        %983 = vmatmul.mubr.f32.gmra.mxu0 %v911
        %v984 = vpop.f32.mrf.mxu0
        %v985 = vadd.f32 0.0, %v984
        %v986 = vpop.f32.mrf.mxu0
        %987 = vdwg.mxu0
        %988 = vrot.lane.b32.xlu0 %v396, 96
        %v989 = vpop.permute.xlu0 %988
        %990 = vrot.lane.b32.xlu0 %v401, 96
        %v991 = vpop.permute.xlu0 %990
        %v995 = vsel %vm294, %v890, 0
        %v998 = vsel %vm294, %v892, 0
        %1000 = vmatprep.subr.mxu0 0.0
        %1001 = vmatpush1.msra.mxu0 0.0
        %1002 = vmatprep.subr.mxu0 0.0
        %1003 = vmatpush1.msra.mxu0 0.0
        %1004 = vmatprep.subr.mxu0 0.0
        %1005 = vmatpush1.msra.mxu0 0.0
        %1006 = vmatprep.subr.mxu0 0.0
        %1007 = vmatpush1.msra.mxu0 0.0
        %1008 = vmatprep.subr.mxu0 0.0
        %1009 = vmatpush1.msra.mxu0 0.0
        %1010 = vmatprep.subr.mxu0 0.0
        %1011 = vmatpush1.msra.mxu0 0.0
        %1012 = vmatprep.subr.mxu0 0.0
        %1013 = vmatpush1.msra.mxu0 0.0
        %1014 = vmatprep.subr.mxu0 0.0
        %1015 = vmatpush1.msra.mxu0 0.0
        %1016 = vmatprep.subr.mxu0 0.0
        %1017 = vmatpush1.msra.mxu0 0.0
        %1018 = vmatprep.subr.mxu0 0.0
        %1019 = vmatpush1.msra.mxu0 0.0
        %1020 = vmatprep.subr.mxu0 0.0
        %1021 = vmatpush1.msra.mxu0 0.0
        %1022 = vmatprep.subr.mxu0 0.0
        %1023 = vmatpush1.msra.mxu0 0.0
        %1024 = vmatprep.subr.mxu0 0.0
        %1025 = vmatpush1.msra.mxu0 0.0
        %1026 = vmatprep.subr.mxu0 0.0
        %1027 = vmatpush1.msra.mxu0 0.0
        %1028 = vmatprep.subr.mxu0 0.0
        %1029 = vmatpush1.msra.mxu0 %v991
        %1030 = vmatprep.subr.mxu0 0.0
        %1031 = vmatpush1.msra.mxu0 %v989
        %1032 = vmatprep.subr.mxu0 0.0
        %1033 = vmatpush2.msra.mxu0 0.0
        %1034 = vmatprep.subr.mxu0 0.0
        %1035 = vmatpush2.msra.mxu0 0.0
        %1036 = vmatprep.subr.mxu0 0.0
        %1037 = vmatpush2.msra.mxu0 0.0
        %1038 = vmatprep.subr.mxu0 0.0
        %1039 = vmatpush2.msra.mxu0 0.0
        %1040 = vmatprep.subr.mxu0 0.0
        %1041 = vmatpush2.msra.mxu0 0.0
        %1042 = vmatprep.subr.mxu0 0.0
        %1043 = vmatpush2.msra.mxu0 0.0
        %1044 = vmatprep.subr.mxu0 0.0
        %1045 = vmatpush2.msra.mxu0 0.0
        %1046 = vmatprep.subr.mxu0 0.0
        %1047 = vmatpush2.msra.mxu0 0.0
        %1048 = vmatprep.subr.mxu0 0.0
        %1049 = vmatpush2.msra.mxu0 0.0
        %1050 = vmatprep.subr.mxu0 0.0
        %1051 = vmatpush2.msra.mxu0 0.0
        %1052 = vmatprep.subr.mxu0 0.0
        %1053 = vmatpush2.msra.mxu0 0.0
        %1054 = vmatprep.subr.mxu0 0.0
        %1055 = vmatpush2.msra.mxu0 0.0
        %1056 = vmatprep.subr.mxu0 0.0
        %1057 = vmatpush2.msra.mxu0 0.0
        %1058 = vmatprep.subr.mxu0 0.0
        %1059 = vmatpush2.msra.mxu0 0.0
        %1060 = vmatprep.subr.mxu0 0.0
        %1061 = vmatpush2.msra.mxu0 0.0
        %1062 = vmatprep.subr.mxu0 0.0
        %1063 = vmatpush2.msra.mxu0 0.0
        %1064 = vmatprep.mubr.f32.mxu0 0.0
        %1065 = vmatmul.mubr.f32.gmra.mxu0 %v995
        %v1066 = vpop.f32.mrf.mxu0
        %v1067 = vadd.f32 0.0, %v1066
        %v1068 = vpop.f32.mrf.mxu0
        %1069 = vmatprep.mubr.f32.mxu0 0.0
        %1070 = vmatmul.mubr.f32.gmra.mxu0 %v998
        %v1071 = vpop.f32.mrf.mxu0
        %v1072 = vadd.f32 0.0, %v1071
        %v1073 = vpop.f32.mrf.mxu0
        %1074 = vdwg.mxu0
        %1075 = vrot.lane.b32.xlu0 %v406, 96
        %v1076 = vpop.permute.xlu0 %1075
        %1077 = vrot.lane.b32.xlu0 %v411, 96
        %v1078 = vpop.permute.xlu0 %1077
        %v1082 = vsel %vm294, %v894, 0
        %v1085 = vsel %vm294, %v896, 0
        %1087 = vmatprep.subr.mxu0 0.0
        %1088 = vmatpush1.msra.mxu0 0.0
        %1089 = vmatprep.subr.mxu0 0.0
        %1090 = vmatpush1.msra.mxu0 0.0
        %1091 = vmatprep.subr.mxu0 0.0
        %1092 = vmatpush1.msra.mxu0 0.0
        %1093 = vmatprep.subr.mxu0 0.0
        %1094 = vmatpush1.msra.mxu0 0.0
        %1095 = vmatprep.subr.mxu0 0.0
        %1096 = vmatpush1.msra.mxu0 0.0
        %1097 = vmatprep.subr.mxu0 0.0
        %1098 = vmatpush1.msra.mxu0 0.0
        %1099 = vmatprep.subr.mxu0 0.0
        %1100 = vmatpush1.msra.mxu0 0.0
        %1101 = vmatprep.subr.mxu0 0.0
        %1102 = vmatpush1.msra.mxu0 0.0
        %1103 = vmatprep.subr.mxu0 0.0
        %1104 = vmatpush1.msra.mxu0 0.0
        %1105 = vmatprep.subr.mxu0 0.0
        %1106 = vmatpush1.msra.mxu0 0.0
        %1107 = vmatprep.subr.mxu0 0.0
        %1108 = vmatpush1.msra.mxu0 0.0
        %1109 = vmatprep.subr.mxu0 0.0
        %1110 = vmatpush1.msra.mxu0 0.0
        %1111 = vmatprep.subr.mxu0 0.0
        %1112 = vmatpush1.msra.mxu0 0.0
        %1113 = vmatprep.subr.mxu0 0.0
        %1114 = vmatpush1.msra.mxu0 0.0
        %1115 = vmatprep.subr.mxu0 0.0
        %1116 = vmatpush1.msra.mxu0 %v1078
        %1117 = vmatprep.subr.mxu0 0.0
        %1118 = vmatpush1.msra.mxu0 %v1076
        %1119 = vmatprep.subr.mxu0 0.0
        %1120 = vmatpush2.msra.mxu0 0.0
        %1121 = vmatprep.subr.mxu0 0.0
        %1122 = vmatpush2.msra.mxu0 0.0
        %1123 = vmatprep.subr.mxu0 0.0
        %1124 = vmatpush2.msra.mxu0 0.0
        %1125 = vmatprep.subr.mxu0 0.0
        %1126 = vmatpush2.msra.mxu0 0.0
        %1127 = vmatprep.subr.mxu0 0.0
        %1128 = vmatpush2.msra.mxu0 0.0
        %1129 = vmatprep.subr.mxu0 0.0
        %1130 = vmatpush2.msra.mxu0 0.0
        %1131 = vmatprep.subr.mxu0 0.0
        %1132 = vmatpush2.msra.mxu0 0.0
        %1133 = vmatprep.subr.mxu0 0.0
        %1134 = vmatpush2.msra.mxu0 0.0
        %1135 = vmatprep.subr.mxu0 0.0
        %1136 = vmatpush2.msra.mxu0 0.0
        %1137 = vmatprep.subr.mxu0 0.0
        %1138 = vmatpush2.msra.mxu0 0.0
        %1139 = vmatprep.subr.mxu0 0.0
        %1140 = vmatpush2.msra.mxu0 0.0
        %1141 = vmatprep.subr.mxu0 0.0
        %1142 = vmatpush2.msra.mxu0 0.0
        %1143 = vmatprep.subr.mxu0 0.0
        %1144 = vmatpush2.msra.mxu0 0.0
        %1145 = vmatprep.subr.mxu0 0.0
        %1146 = vmatpush2.msra.mxu0 0.0
        %1147 = vmatprep.subr.mxu0 0.0
        %1148 = vmatpush2.msra.mxu0 0.0
        %1149 = vmatprep.subr.mxu0 0.0
        %1150 = vmatpush2.msra.mxu0 0.0
        %1151 = vmatprep.mubr.f32.mxu0 0.0
        %1152 = vmatmul.mubr.f32.gmra.mxu0 %v1082
        %v1153 = vpop.f32.mrf.mxu0
        %v1154 = vadd.f32 0.0, %v1153
        %v1155 = vpop.f32.mrf.mxu0
        %1156 = vmatprep.mubr.f32.mxu0 0.0
        %1157 = vmatmul.mubr.f32.gmra.mxu0 %v1085
        %v1158 = vpop.f32.mrf.mxu0
        %v1159 = vadd.f32 0.0, %v1158
        %v1160 = vpop.f32.mrf.mxu0
        %1161 = vdwg.mxu0
        %1162 = vrot.lane.b32.xlu0 %v416, 96
        %v1163 = vpop.permute.xlu0 %1162
        %1164 = vrot.lane.b32.xlu0 %v421, 96
        %v1165 = vpop.permute.xlu0 %1164
        %v1169 = vsel %vm294, %v898, 0
        %v1172 = vsel %vm294, %v900, 0
        %1174 = vmatprep.subr.mxu0 0.0
        %1175 = vmatpush1.msra.mxu0 0.0
        %1176 = vmatprep.subr.mxu0 0.0
        %1177 = vmatpush1.msra.mxu0 0.0
        %1178 = vmatprep.subr.mxu0 0.0
        %1179 = vmatpush1.msra.mxu0 0.0
        %1180 = vmatprep.subr.mxu0 0.0
        %1181 = vmatpush1.msra.mxu0 0.0
        %1182 = vmatprep.subr.mxu0 0.0
        %1183 = vmatpush1.msra.mxu0 0.0
        %1184 = vmatprep.subr.mxu0 0.0
        %1185 = vmatpush1.msra.mxu0 0.0
        %1186 = vmatprep.subr.mxu0 0.0
        %1187 = vmatpush1.msra.mxu0 0.0
        %1188 = vmatprep.subr.mxu0 0.0
        %1189 = vmatpush1.msra.mxu0 0.0
        %1190 = vmatprep.subr.mxu0 0.0
        %1191 = vmatpush1.msra.mxu0 0.0
        %1192 = vmatprep.subr.mxu0 0.0
        %1193 = vmatpush1.msra.mxu0 0.0
        %1194 = vmatprep.subr.mxu0 0.0
        %1195 = vmatpush1.msra.mxu0 0.0
        %1196 = vmatprep.subr.mxu0 0.0
        %1197 = vmatpush1.msra.mxu0 0.0
        %1198 = vmatprep.subr.mxu0 0.0
        %1199 = vmatpush1.msra.mxu0 0.0
        %1200 = vmatprep.subr.mxu0 0.0
        %1201 = vmatpush1.msra.mxu0 0.0
        %1202 = vmatprep.subr.mxu0 0.0
        %1203 = vmatpush1.msra.mxu0 %v1165
        %1204 = vmatprep.subr.mxu0 0.0
        %1205 = vmatpush1.msra.mxu0 %v1163
        %1206 = vmatprep.subr.mxu0 0.0
        %1207 = vmatpush2.msra.mxu0 0.0
        %1208 = vmatprep.subr.mxu0 0.0
        %1209 = vmatpush2.msra.mxu0 0.0
        %1210 = vmatprep.subr.mxu0 0.0
        %1211 = vmatpush2.msra.mxu0 0.0
        %1212 = vmatprep.subr.mxu0 0.0
        %1213 = vmatpush2.msra.mxu0 0.0
        %1214 = vmatprep.subr.mxu0 0.0
        %1215 = vmatpush2.msra.mxu0 0.0
        %1216 = vmatprep.subr.mxu0 0.0
        %1217 = vmatpush2.msra.mxu0 0.0
        %1218 = vmatprep.subr.mxu0 0.0
        %1219 = vmatpush2.msra.mxu0 0.0
        %1220 = vmatprep.subr.mxu0 0.0
        %1221 = vmatpush2.msra.mxu0 0.0
        %1222 = vmatprep.subr.mxu0 0.0
        %1223 = vmatpush2.msra.mxu0 0.0
        %1224 = vmatprep.subr.mxu0 0.0
        %1225 = vmatpush2.msra.mxu0 0.0
        %1226 = vmatprep.subr.mxu0 0.0
        %1227 = vmatpush2.msra.mxu0 0.0
        %1228 = vmatprep.subr.mxu0 0.0
        %1229 = vmatpush2.msra.mxu0 0.0
        %1230 = vmatprep.subr.mxu0 0.0
        %1231 = vmatpush2.msra.mxu0 0.0
        %1232 = vmatprep.subr.mxu0 0.0
        %1233 = vmatpush2.msra.mxu0 0.0
        %1234 = vmatprep.subr.mxu0 0.0
        %1235 = vmatpush2.msra.mxu0 0.0
        %1236 = vmatprep.subr.mxu0 0.0
        %1237 = vmatpush2.msra.mxu0 0.0
        %1238 = vmatprep.mubr.f32.mxu0 0.0
        %1239 = vmatmul.mubr.f32.gmra.mxu0 %v1169
        %v1240 = vpop.f32.mrf.mxu0
        %v1241 = vadd.f32 0.0, %v1240
        %v1242 = vpop.f32.mrf.mxu0
        %1243 = vmatprep.mubr.f32.mxu0 0.0
        %1244 = vmatmul.mubr.f32.gmra.mxu0 %v1172
        %v1245 = vpop.f32.mrf.mxu0
        %v1246 = vadd.f32 0.0, %v1245
        %v1247 = vpop.f32.mrf.mxu0
        %1248 = vdwg.mxu0
        %1249 = vst.msk [vmem:[#allocation2] sm:$0xff] %vm462, %v980
        %1250 = vst.msk [vmem:[#allocation2 + $0x8] sm:$0xff] %vm462, %v985
        %1251 = vst.msk [vmem:[#allocation2 + $0x10] sm:$0xff] %vm462, %v1067
        %1252 = vst.msk [vmem:[#allocation2 + $0x18] sm:$0xff] %vm462, %v1072
        %1253 = vst.msk [vmem:[#allocation2 + $0x20] sm:$0xff] %vm462, %v1154
        %1254 = vst.msk [vmem:[#allocation2 + $0x28] sm:$0xff] %vm462, %v1159
        %1255 = vst.msk [vmem:[#allocation2 + $0x30] sm:$0xff] %vm462, %v1241
        %1256 = vst.msk [vmem:[#allocation2 + $0x38] sm:$0xff] %vm462, %v1246
        %1257 = vrot.lane.b32.xlu0 %v386, 120
        %v1258 = vpop.permute.xlu0 %1257
        %1259 = vrot.lane.b32.xlu0 %v391, 120
        %v1260 = vpop.permute.xlu0 %1259
        %1261 = vrot.lane.b32.xlu0 %v386, 104
        %v1262 = vpop.permute.xlu0 %1261
        %1263 = vrot.lane.b32.xlu0 %v391, 104
        %v1264 = vpop.permute.xlu0 %1263
        %v1265 = vsel %vm462, %v1258, 0
        %v1267 = vsel %vm462, %v1260, 0
        %v1269 = vsel %vm462, %v1262, 0
        %v1271 = vsel %vm462, %v1264, 0
        %1273 = vmatprep.subr.mxu0 0.0
        %1274 = vmatpush1.xpose.msra.mxu0 0.0
        %1275 = vmatprep.subr.mxu0 0.0
        %1276 = vmatpush1.xpose.msra.mxu0 0.0
        %1277 = vmatprep.subr.mxu0 0.0
        %1278 = vmatpush1.xpose.msra.mxu0 0.0
        %1279 = vmatprep.subr.mxu0 0.0
        %1280 = vmatpush1.xpose.msra.mxu0 0.0
        %1281 = vmatprep.subr.mxu0 0.0
        %1282 = vmatpush1.xpose.msra.mxu0 0.0
        %1283 = vmatprep.subr.mxu0 0.0
        %1284 = vmatpush1.xpose.msra.mxu0 0.0
        %1285 = vmatprep.subr.mxu0 0.0
        %1286 = vmatpush1.xpose.msra.mxu0 0.0
        %1287 = vmatprep.subr.mxu0 0.0
        %1288 = vmatpush1.xpose.msra.mxu0 0.0
        %1289 = vmatprep.subr.mxu0 0.0
        %1290 = vmatpush1.xpose.msra.mxu0 0.0
        %1291 = vmatprep.subr.mxu0 0.0
        %1292 = vmatpush1.xpose.msra.mxu0 0.0
        %1293 = vmatprep.subr.mxu0 0.0
        %1294 = vmatpush1.xpose.msra.mxu0 0.0
        %1295 = vmatprep.subr.mxu0 0.0
        %1296 = vmatpush1.xpose.msra.mxu0 0.0
        %1297 = vmatprep.subr.mxu0 0.0
        %1298 = vmatpush1.xpose.msra.mxu0 0.0
        %1299 = vmatprep.subr.mxu0 0.0
        %1300 = vmatpush1.xpose.msra.mxu0 0.0
        %1301 = vmatprep.subr.mxu0 0.0
        %1302 = vmatpush1.xpose.msra.mxu0 %v1271
        %1303 = vmatprep.subr.mxu0 0.0
        %1304 = vmatpush1.xpose.msra.mxu0 %v1269
        %1305 = vmatprep.subr.mxu0 0.0
        %1306 = vmatpush2.xpose.msra.mxu0 0.0
        %1307 = vmatprep.subr.mxu0 0.0
        %1308 = vmatpush2.xpose.msra.mxu0 0.0
        %1309 = vmatprep.subr.mxu0 0.0
        %1310 = vmatpush2.xpose.msra.mxu0 0.0
        %1311 = vmatprep.subr.mxu0 0.0
        %1312 = vmatpush2.xpose.msra.mxu0 0.0
        %1313 = vmatprep.subr.mxu0 0.0
        %1314 = vmatpush2.xpose.msra.mxu0 0.0
        %1315 = vmatprep.subr.mxu0 0.0
        %1316 = vmatpush2.xpose.msra.mxu0 0.0
        %1317 = vmatprep.subr.mxu0 0.0
        %1318 = vmatpush2.xpose.msra.mxu0 0.0
        %1319 = vmatprep.subr.mxu0 0.0
        %1320 = vmatpush2.xpose.msra.mxu0 0.0
        %1321 = vmatprep.subr.mxu0 0.0
        %1322 = vmatpush2.xpose.msra.mxu0 0.0
        %1323 = vmatprep.subr.mxu0 0.0
        %1324 = vmatpush2.xpose.msra.mxu0 0.0
        %1325 = vmatprep.subr.mxu0 0.0
        %1326 = vmatpush2.xpose.msra.mxu0 0.0
        %1327 = vmatprep.subr.mxu0 0.0
        %1328 = vmatpush2.xpose.msra.mxu0 0.0
        %1329 = vmatprep.subr.mxu0 0.0
        %1330 = vmatpush2.xpose.msra.mxu0 0.0
        %1331 = vmatprep.subr.mxu0 0.0
        %1332 = vmatpush2.xpose.msra.mxu0 0.0
        %1333 = vmatprep.subr.mxu0 0.0
        %1334 = vmatpush2.xpose.msra.mxu0 0.0
        %1335 = vmatprep.subr.mxu0 0.0
        %1336 = vmatpush2.xpose.msra.mxu0 0.0
        %1337 = vmatprep.mubr.f32.mxu0 0.0
        %1338 = vmatmul.mubr.f32.gmra.mxu0 %v1265
        %v1339 = vpop.f32.mrf.mxu0
        %v1340 = vadd.f32 %v430, %v1339
        %v1341 = vpop.f32.mrf.mxu0
        %1342 = vmatprep.mubr.f32.mxu0 0.0
        %1343 = vmatmul.mubr.f32.gmra.mxu0 %v1267
        %v1344 = vpop.f32.mrf.mxu0
        %v1345 = vadd.f32 %v431, %v1344
        %v1346 = vpop.f32.mrf.mxu0
        %1347 = vdwg.mxu0
        %1348 = vrot.lane.b32.xlu0 %v396, 120
        %v1349 = vpop.permute.xlu0 %1348
        %1350 = vrot.lane.b32.xlu0 %v401, 120
        %v1351 = vpop.permute.xlu0 %1350
        %1352 = vrot.lane.b32.xlu0 %v396, 104
        %v1353 = vpop.permute.xlu0 %1352
        %1354 = vrot.lane.b32.xlu0 %v401, 104
        %v1355 = vpop.permute.xlu0 %1354
        %v1356 = vsel %vm462, %v1349, 0
        %v1358 = vsel %vm462, %v1351, 0
        %v1360 = vsel %vm462, %v1353, 0
        %v1362 = vsel %vm462, %v1355, 0
        %1364 = vmatprep.subr.mxu0 0.0
        %1365 = vmatpush1.xpose.msra.mxu0 0.0
        %1366 = vmatprep.subr.mxu0 0.0
        %1367 = vmatpush1.xpose.msra.mxu0 0.0
        %1368 = vmatprep.subr.mxu0 0.0
        %1369 = vmatpush1.xpose.msra.mxu0 0.0
        %1370 = vmatprep.subr.mxu0 0.0
        %1371 = vmatpush1.xpose.msra.mxu0 0.0
        %1372 = vmatprep.subr.mxu0 0.0
        %1373 = vmatpush1.xpose.msra.mxu0 0.0
        %1374 = vmatprep.subr.mxu0 0.0
        %1375 = vmatpush1.xpose.msra.mxu0 0.0
        %1376 = vmatprep.subr.mxu0 0.0
        %1377 = vmatpush1.xpose.msra.mxu0 0.0
        %1378 = vmatprep.subr.mxu0 0.0
        %1379 = vmatpush1.xpose.msra.mxu0 0.0
        %1380 = vmatprep.subr.mxu0 0.0
        %1381 = vmatpush1.xpose.msra.mxu0 0.0
        %1382 = vmatprep.subr.mxu0 0.0
        %1383 = vmatpush1.xpose.msra.mxu0 0.0
        %1384 = vmatprep.subr.mxu0 0.0
        %1385 = vmatpush1.xpose.msra.mxu0 0.0
        %1386 = vmatprep.subr.mxu0 0.0
        %1387 = vmatpush1.xpose.msra.mxu0 0.0
        %1388 = vmatprep.subr.mxu0 0.0
        %1389 = vmatpush1.xpose.msra.mxu0 0.0
        %1390 = vmatprep.subr.mxu0 0.0
        %1391 = vmatpush1.xpose.msra.mxu0 0.0
        %1392 = vmatprep.subr.mxu0 0.0
        %1393 = vmatpush1.xpose.msra.mxu0 %v1362
        %1394 = vmatprep.subr.mxu0 0.0
        %1395 = vmatpush1.xpose.msra.mxu0 %v1360
        %1396 = vmatprep.subr.mxu0 0.0
        %1397 = vmatpush2.xpose.msra.mxu0 0.0
        %1398 = vmatprep.subr.mxu0 0.0
        %1399 = vmatpush2.xpose.msra.mxu0 0.0
        %1400 = vmatprep.subr.mxu0 0.0
        %1401 = vmatpush2.xpose.msra.mxu0 0.0
        %1402 = vmatprep.subr.mxu0 0.0
        %1403 = vmatpush2.xpose.msra.mxu0 0.0
        %1404 = vmatprep.subr.mxu0 0.0
        %1405 = vmatpush2.xpose.msra.mxu0 0.0
        %1406 = vmatprep.subr.mxu0 0.0
        %1407 = vmatpush2.xpose.msra.mxu0 0.0
        %1408 = vmatprep.subr.mxu0 0.0
        %1409 = vmatpush2.xpose.msra.mxu0 0.0
        %1410 = vmatprep.subr.mxu0 0.0
        %1411 = vmatpush2.xpose.msra.mxu0 0.0
        %1412 = vmatprep.subr.mxu0 0.0
        %1413 = vmatpush2.xpose.msra.mxu0 0.0
        %1414 = vmatprep.subr.mxu0 0.0
        %1415 = vmatpush2.xpose.msra.mxu0 0.0
        %1416 = vmatprep.subr.mxu0 0.0
        %1417 = vmatpush2.xpose.msra.mxu0 0.0
        %1418 = vmatprep.subr.mxu0 0.0
        %1419 = vmatpush2.xpose.msra.mxu0 0.0
        %1420 = vmatprep.subr.mxu0 0.0
        %1421 = vmatpush2.xpose.msra.mxu0 0.0
        %1422 = vmatprep.subr.mxu0 0.0
        %1423 = vmatpush2.xpose.msra.mxu0 0.0
        %1424 = vmatprep.subr.mxu0 0.0
        %1425 = vmatpush2.xpose.msra.mxu0 0.0
        %1426 = vmatprep.subr.mxu0 0.0
        %1427 = vmatpush2.xpose.msra.mxu0 0.0
        %1428 = vmatprep.mubr.f32.mxu0 0.0
        %1429 = vmatmul.mubr.f32.gmra.mxu0 %v1356
        %v1430 = vpop.f32.mrf.mxu0
        %v1431 = vadd.f32 %v438, %v1430
        %v1432 = vpop.f32.mrf.mxu0
        %1433 = vmatprep.mubr.f32.mxu0 0.0
        %1434 = vmatmul.mubr.f32.gmra.mxu0 %v1358
        %v1435 = vpop.f32.mrf.mxu0
        %v1436 = vadd.f32 %v439, %v1435
        %v1437 = vpop.f32.mrf.mxu0
        %1438 = vdwg.mxu0
        %1439 = vrot.lane.b32.xlu0 %v406, 120
        %v1440 = vpop.permute.xlu0 %1439
        %1441 = vrot.lane.b32.xlu0 %v411, 120
        %v1442 = vpop.permute.xlu0 %1441
        %1443 = vrot.lane.b32.xlu0 %v406, 104
        %v1444 = vpop.permute.xlu0 %1443
        %1445 = vrot.lane.b32.xlu0 %v411, 104
        %v1446 = vpop.permute.xlu0 %1445
        %v1447 = vsel %vm462, %v1440, 0
        %v1449 = vsel %vm462, %v1442, 0
        %v1451 = vsel %vm462, %v1444, 0
        %v1453 = vsel %vm462, %v1446, 0
        %1455 = vmatprep.subr.mxu0 0.0
        %1456 = vmatpush1.xpose.msra.mxu0 0.0
        %1457 = vmatprep.subr.mxu0 0.0
        %1458 = vmatpush1.xpose.msra.mxu0 0.0
        %1459 = vmatprep.subr.mxu0 0.0
        %1460 = vmatpush1.xpose.msra.mxu0 0.0
        %1461 = vmatprep.subr.mxu0 0.0
        %1462 = vmatpush1.xpose.msra.mxu0 0.0
        %1463 = vmatprep.subr.mxu0 0.0
        %1464 = vmatpush1.xpose.msra.mxu0 0.0
        %1465 = vmatprep.subr.mxu0 0.0
        %1466 = vmatpush1.xpose.msra.mxu0 0.0
        %1467 = vmatprep.subr.mxu0 0.0
        %1468 = vmatpush1.xpose.msra.mxu0 0.0
        %1469 = vmatprep.subr.mxu0 0.0
        %1470 = vmatpush1.xpose.msra.mxu0 0.0
        %1471 = vmatprep.subr.mxu0 0.0
        %1472 = vmatpush1.xpose.msra.mxu0 0.0
        %1473 = vmatprep.subr.mxu0 0.0
        %1474 = vmatpush1.xpose.msra.mxu0 0.0
        %1475 = vmatprep.subr.mxu0 0.0
        %1476 = vmatpush1.xpose.msra.mxu0 0.0
        %1477 = vmatprep.subr.mxu0 0.0
        %1478 = vmatpush1.xpose.msra.mxu0 0.0
        %1479 = vmatprep.subr.mxu0 0.0
        %1480 = vmatpush1.xpose.msra.mxu0 0.0
        %1481 = vmatprep.subr.mxu0 0.0
        %1482 = vmatpush1.xpose.msra.mxu0 0.0
        %1483 = vmatprep.subr.mxu0 0.0
        %1484 = vmatpush1.xpose.msra.mxu0 %v1453
        %1485 = vmatprep.subr.mxu0 0.0
        %1486 = vmatpush1.xpose.msra.mxu0 %v1451
        %1487 = vmatprep.subr.mxu0 0.0
        %1488 = vmatpush2.xpose.msra.mxu0 0.0
        %1489 = vmatprep.subr.mxu0 0.0
        %1490 = vmatpush2.xpose.msra.mxu0 0.0
        %1491 = vmatprep.subr.mxu0 0.0
        %1492 = vmatpush2.xpose.msra.mxu0 0.0
        %1493 = vmatprep.subr.mxu0 0.0
        %1494 = vmatpush2.xpose.msra.mxu0 0.0
        %1495 = vmatprep.subr.mxu0 0.0
        %1496 = vmatpush2.xpose.msra.mxu0 0.0
        %1497 = vmatprep.subr.mxu0 0.0
        %1498 = vmatpush2.xpose.msra.mxu0 0.0
        %1499 = vmatprep.subr.mxu0 0.0
        %1500 = vmatpush2.xpose.msra.mxu0 0.0
        %1501 = vmatprep.subr.mxu0 0.0
        %1502 = vmatpush2.xpose.msra.mxu0 0.0
        %1503 = vmatprep.subr.mxu0 0.0
        %1504 = vmatpush2.xpose.msra.mxu0 0.0
        %1505 = vmatprep.subr.mxu0 0.0
        %1506 = vmatpush2.xpose.msra.mxu0 0.0
        %1507 = vmatprep.subr.mxu0 0.0
        %1508 = vmatpush2.xpose.msra.mxu0 0.0
        %1509 = vmatprep.subr.mxu0 0.0
        %1510 = vmatpush2.xpose.msra.mxu0 0.0
        %1511 = vmatprep.subr.mxu0 0.0
        %1512 = vmatpush2.xpose.msra.mxu0 0.0
        %1513 = vmatprep.subr.mxu0 0.0
        %1514 = vmatpush2.xpose.msra.mxu0 0.0
        %1515 = vmatprep.subr.mxu0 0.0
        %1516 = vmatpush2.xpose.msra.mxu0 0.0
        %1517 = vmatprep.subr.mxu0 0.0
        %1518 = vmatpush2.xpose.msra.mxu0 0.0
        %1519 = vmatprep.mubr.f32.mxu0 0.0
        %1520 = vmatmul.mubr.f32.gmra.mxu0 %v1447
        %v1521 = vpop.f32.mrf.mxu0
        %v1522 = vadd.f32 %v446, %v1521
        %v1523 = vpop.f32.mrf.mxu0
        %1524 = vmatprep.mubr.f32.mxu0 0.0
        %1525 = vmatmul.mubr.f32.gmra.mxu0 %v1449
        %v1526 = vpop.f32.mrf.mxu0
        %v1527 = vadd.f32 %v447, %v1526
        %v1528 = vpop.f32.mrf.mxu0
        %1529 = vdwg.mxu0
        %1530 = vrot.lane.b32.xlu0 %v416, 120
        %v1531 = vpop.permute.xlu0 %1530
        %1532 = vrot.lane.b32.xlu0 %v421, 120
        %v1533 = vpop.permute.xlu0 %1532
        %1534 = vrot.lane.b32.xlu0 %v416, 104
        %v1535 = vpop.permute.xlu0 %1534
        %1536 = vrot.lane.b32.xlu0 %v421, 104
        %v1537 = vpop.permute.xlu0 %1536
        %v1538 = vsel %vm462, %v1531, 0
        %v1540 = vsel %vm462, %v1533, 0
        %v1542 = vsel %vm462, %v1535, 0
        %v1544 = vsel %vm462, %v1537, 0
        %1546 = vmatprep.subr.mxu0 0.0
        %1547 = vmatpush1.xpose.msra.mxu0 0.0
        %1548 = vmatprep.subr.mxu0 0.0
        %1549 = vmatpush1.xpose.msra.mxu0 0.0
        %1550 = vmatprep.subr.mxu0 0.0
        %1551 = vmatpush1.xpose.msra.mxu0 0.0
        %1552 = vmatprep.subr.mxu0 0.0
        %1553 = vmatpush1.xpose.msra.mxu0 0.0
        %1554 = vmatprep.subr.mxu0 0.0
        %1555 = vmatpush1.xpose.msra.mxu0 0.0
        %1556 = vmatprep.subr.mxu0 0.0
        %1557 = vmatpush1.xpose.msra.mxu0 0.0
        %1558 = vmatprep.subr.mxu0 0.0
        %1559 = vmatpush1.xpose.msra.mxu0 0.0
        %1560 = vmatprep.subr.mxu0 0.0
        %1561 = vmatpush1.xpose.msra.mxu0 0.0
        %1562 = vmatprep.subr.mxu0 0.0
        %1563 = vmatpush1.xpose.msra.mxu0 0.0
        %1564 = vmatprep.subr.mxu0 0.0
        %1565 = vmatpush1.xpose.msra.mxu0 0.0
        %1566 = vmatprep.subr.mxu0 0.0
        %1567 = vmatpush1.xpose.msra.mxu0 0.0
        %1568 = vmatprep.subr.mxu0 0.0
        %1569 = vmatpush1.xpose.msra.mxu0 0.0
        %1570 = vmatprep.subr.mxu0 0.0
        %1571 = vmatpush1.xpose.msra.mxu0 0.0
        %1572 = vmatprep.subr.mxu0 0.0
        %1573 = vmatpush1.xpose.msra.mxu0 0.0
        %1574 = vmatprep.subr.mxu0 0.0
        %1575 = vmatpush1.xpose.msra.mxu0 %v1544
        %1576 = vmatprep.subr.mxu0 0.0
        %1577 = vmatpush1.xpose.msra.mxu0 %v1542
        %1578 = vmatprep.subr.mxu0 0.0
        %1579 = vmatpush2.xpose.msra.mxu0 0.0
        %1580 = vmatprep.subr.mxu0 0.0
        %1581 = vmatpush2.xpose.msra.mxu0 0.0
        %1582 = vmatprep.subr.mxu0 0.0
        %1583 = vmatpush2.xpose.msra.mxu0 0.0
        %1584 = vmatprep.subr.mxu0 0.0
        %1585 = vmatpush2.xpose.msra.mxu0 0.0
        %1586 = vmatprep.subr.mxu0 0.0
        %1587 = vmatpush2.xpose.msra.mxu0 0.0
        %1588 = vmatprep.subr.mxu0 0.0
        %1589 = vmatpush2.xpose.msra.mxu0 0.0
        %1590 = vmatprep.subr.mxu0 0.0
        %1591 = vmatpush2.xpose.msra.mxu0 0.0
        %1592 = vmatprep.subr.mxu0 0.0
        %1593 = vmatpush2.xpose.msra.mxu0 0.0
        %1594 = vmatprep.subr.mxu0 0.0
        %1595 = vmatpush2.xpose.msra.mxu0 0.0
        %1596 = vmatprep.subr.mxu0 0.0
        %1597 = vmatpush2.xpose.msra.mxu0 0.0
        %1598 = vmatprep.subr.mxu0 0.0
        %1599 = vmatpush2.xpose.msra.mxu0 0.0
        %1600 = vmatprep.subr.mxu0 0.0
        %1601 = vmatpush2.xpose.msra.mxu0 0.0
        %1602 = vmatprep.subr.mxu0 0.0
        %1603 = vmatpush2.xpose.msra.mxu0 0.0
        %1604 = vmatprep.subr.mxu0 0.0
        %1605 = vmatpush2.xpose.msra.mxu0 0.0
        %1606 = vmatprep.subr.mxu0 0.0
        %1607 = vmatpush2.xpose.msra.mxu0 0.0
        %1608 = vmatprep.subr.mxu0 0.0
        %1609 = vmatpush2.xpose.msra.mxu0 0.0
        %1610 = vmatprep.mubr.f32.mxu0 0.0
        %1611 = vmatmul.mubr.f32.gmra.mxu0 %v1538
        %v1612 = vpop.f32.mrf.mxu0
        %v1613 = vadd.f32 %v454, %v1612
        %v1614 = vpop.f32.mrf.mxu0
        %1615 = vmatprep.mubr.f32.mxu0 0.0
        %1616 = vmatmul.mubr.f32.gmra.mxu0 %v1540
        %v1617 = vpop.f32.mrf.mxu0
        %v1618 = vadd.f32 %v455, %v1617
        %v1619 = vpop.f32.mrf.mxu0
        %1620 = vdwg.mxu0
        %v1621 = vsel %vm294, %v1340, -inf
        %1622 = vmax.xlane.f32.xlu0 %v1621
        %v1623 = vpop.xlane.xlu0 %1622
        %v1624 = vsel %vm294, %v1345, -inf
        %1625 = vmax.xlane.f32.xlu0 %v1624
        %v1626 = vpop.xlane.xlu0 %1625
        %v1627 = vsel %vm294, %v1431, -inf
        %1628 = vmax.xlane.f32.xlu0 %v1627
        %v1629 = vpop.xlane.xlu0 %1628
        %v1630 = vsel %vm294, %v1436, -inf
        %1631 = vmax.xlane.f32.xlu0 %v1630
        %v1632 = vpop.xlane.xlu0 %1631
        %v1633 = vsel %vm294, %v1522, -inf
        %1634 = vmax.xlane.f32.xlu0 %v1633
        %v1635 = vpop.xlane.xlu0 %1634
        %v1636 = vsel %vm294, %v1527, -inf
        %1637 = vmax.xlane.f32.xlu0 %v1636
        %v1638 = vpop.xlane.xlu0 %1637
        %v1639 = vsel %vm294, %v1613, -inf
        %1640 = vmax.xlane.f32.xlu0 %v1639
        %v1641 = vpop.xlane.xlu0 %1640
        %v1642 = vsel %vm294, %v1618, -inf
        %1643 = vmax.xlane.f32.xlu0 %v1642
        %v1644 = vpop.xlane.xlu0 %1643
        %v1645 = vsub.f32 %v1340, %v1623
        %v1646 = vsub.f32 %v1345, %v1626
        %v1647 = vsub.f32 %v1431, %v1629
        %v1648 = vsub.f32 %v1436, %v1632
        %v1649 = vsub.f32 %v1522, %v1635
        %v1650 = vsub.f32 %v1527, %v1638
        %v1651 = vsub.f32 %v1613, %v1641
        %v1652 = vsub.f32 %v1618, %v1644
        %v1653 = vmul.f32 %v1645, 1.442695
        %v1654 = vpow.pop %v1653
        %v1655 = vmul.f32 %v1646, 1.442695
        %v1656 = vpow.pop %v1655
        %v1657 = vmul.f32 %v1647, 1.442695
        %v1658 = vpow.pop %v1657
        %v1659 = vmul.f32 %v1648, 1.442695
        %v1660 = vpow.pop %v1659
        %v1661 = vmul.f32 %v1649, 1.442695
        %v1662 = vpow.pop %v1661
        %v1663 = vmul.f32 %v1650, 1.442695
        %v1664 = vpow.pop %v1663
        %v1665 = vmul.f32 %v1651, 1.442695
        %v1666 = vpow.pop %v1665
        %v1667 = vmul.f32 %v1652, 1.442695
        %v1668 = vpow.pop %v1667
        %v1669 = vsel %vm294, %v1654, 0.0
        %1670 = vadd.xlane.f32.xlu0 %v1669
        %v1671 = vpop.xlane.xlu0 %1670
        %v1672 = vsel %vm294, %v1656, 0.0
        %1673 = vadd.xlane.f32.xlu0 %v1672
        %v1674 = vpop.xlane.xlu0 %1673
        %v1675 = vsel %vm294, %v1658, 0.0
        %1676 = vadd.xlane.f32.xlu0 %v1675
        %v1677 = vpop.xlane.xlu0 %1676
        %v1678 = vsel %vm294, %v1660, 0.0
        %1679 = vadd.xlane.f32.xlu0 %v1678
        %v1680 = vpop.xlane.xlu0 %1679
        %v1681 = vsel %vm294, %v1662, 0.0
        %1682 = vadd.xlane.f32.xlu0 %v1681
        %v1683 = vpop.xlane.xlu0 %1682
        %v1684 = vsel %vm294, %v1664, 0.0
        %1685 = vadd.xlane.f32.xlu0 %v1684
        %v1686 = vpop.xlane.xlu0 %1685
        %v1687 = vsel %vm294, %v1666, 0.0
        %1688 = vadd.xlane.f32.xlu0 %v1687
        %v1689 = vpop.xlane.xlu0 %1688
        %v1690 = vsel %vm294, %v1668, 0.0
        %1691 = vadd.xlane.f32.xlu0 %v1690
        %v1692 = vpop.xlane.xlu0 %1691
        %v1693 = vrcp.pop %v1671
        %v1694 = vmul.f32 %v1654, %v1693
        %v1695 = vrcp.pop %v1674
        %v1696 = vmul.f32 %v1656, %v1695
        %v1697 = vrcp.pop %v1677
        %v1698 = vmul.f32 %v1658, %v1697
        %v1699 = vrcp.pop %v1680
        %v1700 = vmul.f32 %v1660, %v1699
        %v1701 = vrcp.pop %v1683
        %v1702 = vmul.f32 %v1662, %v1701
        %v1703 = vrcp.pop %v1686
        %v1704 = vmul.f32 %v1664, %v1703
        %v1705 = vrcp.pop %v1689
        %v1706 = vmul.f32 %v1666, %v1705
        %v1707 = vrcp.pop %v1692
        %v1708 = vmul.f32 %v1668, %v1707
        %1709 = vrot.lane.b32.xlu0 %v386, 88
        %v1710 = vpop.permute.xlu0 %1709
        %1711 = vrot.lane.b32.xlu0 %v391, 88
        %v1712 = vpop.permute.xlu0 %1711
        %v1716 = vsel %vm294, %v1694, 0
        %v1719 = vsel %vm294, %v1696, 0
        %1721 = vmatprep.subr.mxu0 0.0
        %1722 = vmatpush1.msra.mxu0 0.0
        %1723 = vmatprep.subr.mxu0 0.0
        %1724 = vmatpush1.msra.mxu0 0.0
        %1725 = vmatprep.subr.mxu0 0.0
        %1726 = vmatpush1.msra.mxu0 0.0
        %1727 = vmatprep.subr.mxu0 0.0
        %1728 = vmatpush1.msra.mxu0 0.0
        %1729 = vmatprep.subr.mxu0 0.0
        %1730 = vmatpush1.msra.mxu0 0.0
        %1731 = vmatprep.subr.mxu0 0.0
        %1732 = vmatpush1.msra.mxu0 0.0
        %1733 = vmatprep.subr.mxu0 0.0
        %1734 = vmatpush1.msra.mxu0 0.0
        %1735 = vmatprep.subr.mxu0 0.0
        %1736 = vmatpush1.msra.mxu0 0.0
        %1737 = vmatprep.subr.mxu0 0.0
        %1738 = vmatpush1.msra.mxu0 0.0
        %1739 = vmatprep.subr.mxu0 0.0
        %1740 = vmatpush1.msra.mxu0 0.0
        %1741 = vmatprep.subr.mxu0 0.0
        %1742 = vmatpush1.msra.mxu0 0.0
        %1743 = vmatprep.subr.mxu0 0.0
        %1744 = vmatpush1.msra.mxu0 0.0
        %1745 = vmatprep.subr.mxu0 0.0
        %1746 = vmatpush1.msra.mxu0 0.0
        %1747 = vmatprep.subr.mxu0 0.0
        %1748 = vmatpush1.msra.mxu0 0.0
        %1749 = vmatprep.subr.mxu0 0.0
        %1750 = vmatpush1.msra.mxu0 %v1712
        %1751 = vmatprep.subr.mxu0 0.0
        %1752 = vmatpush1.msra.mxu0 %v1710
        %1753 = vmatprep.subr.mxu0 0.0
        %1754 = vmatpush2.msra.mxu0 0.0
        %1755 = vmatprep.subr.mxu0 0.0
        %1756 = vmatpush2.msra.mxu0 0.0
        %1757 = vmatprep.subr.mxu0 0.0
        %1758 = vmatpush2.msra.mxu0 0.0
        %1759 = vmatprep.subr.mxu0 0.0
        %1760 = vmatpush2.msra.mxu0 0.0
        %1761 = vmatprep.subr.mxu0 0.0
        %1762 = vmatpush2.msra.mxu0 0.0
        %1763 = vmatprep.subr.mxu0 0.0
        %1764 = vmatpush2.msra.mxu0 0.0
        %1765 = vmatprep.subr.mxu0 0.0
        %1766 = vmatpush2.msra.mxu0 0.0
        %1767 = vmatprep.subr.mxu0 0.0
        %1768 = vmatpush2.msra.mxu0 0.0
        %1769 = vmatprep.subr.mxu0 0.0
        %1770 = vmatpush2.msra.mxu0 0.0
        %1771 = vmatprep.subr.mxu0 0.0
        %1772 = vmatpush2.msra.mxu0 0.0
        %1773 = vmatprep.subr.mxu0 0.0
        %1774 = vmatpush2.msra.mxu0 0.0
        %1775 = vmatprep.subr.mxu0 0.0
        %1776 = vmatpush2.msra.mxu0 0.0
        %1777 = vmatprep.subr.mxu0 0.0
        %1778 = vmatpush2.msra.mxu0 0.0
        %1779 = vmatprep.subr.mxu0 0.0
        %1780 = vmatpush2.msra.mxu0 0.0
        %1781 = vmatprep.subr.mxu0 0.0
        %1782 = vmatpush2.msra.mxu0 0.0
        %1783 = vmatprep.subr.mxu0 0.0
        %1784 = vmatpush2.msra.mxu0 0.0
        %1785 = vmatprep.mubr.f32.mxu0 0.0
        %1786 = vmatmul.mubr.f32.gmra.mxu0 %v1716
        %v1787 = vpop.f32.mrf.mxu0
        %v1788 = vadd.f32 0.0, %v1787
        %v1789 = vpop.f32.mrf.mxu0
        %1790 = vmatprep.mubr.f32.mxu0 0.0
        %1791 = vmatmul.mubr.f32.gmra.mxu0 %v1719
        %v1792 = vpop.f32.mrf.mxu0
        %v1793 = vadd.f32 0.0, %v1792
        %v1794 = vpop.f32.mrf.mxu0
        %1795 = vdwg.mxu0
        %1796 = vrot.lane.b32.xlu0 %v396, 88
        %v1797 = vpop.permute.xlu0 %1796
        %1798 = vrot.lane.b32.xlu0 %v401, 88
        %v1799 = vpop.permute.xlu0 %1798
        %v1803 = vsel %vm294, %v1698, 0
        %v1806 = vsel %vm294, %v1700, 0
        %1808 = vmatprep.subr.mxu0 0.0
        %1809 = vmatpush1.msra.mxu0 0.0
        %1810 = vmatprep.subr.mxu0 0.0
        %1811 = vmatpush1.msra.mxu0 0.0
        %1812 = vmatprep.subr.mxu0 0.0
        %1813 = vmatpush1.msra.mxu0 0.0
        %1814 = vmatprep.subr.mxu0 0.0
        %1815 = vmatpush1.msra.mxu0 0.0
        %1816 = vmatprep.subr.mxu0 0.0
        %1817 = vmatpush1.msra.mxu0 0.0
        %1818 = vmatprep.subr.mxu0 0.0
        %1819 = vmatpush1.msra.mxu0 0.0
        %1820 = vmatprep.subr.mxu0 0.0
        %1821 = vmatpush1.msra.mxu0 0.0
        %1822 = vmatprep.subr.mxu0 0.0
        %1823 = vmatpush1.msra.mxu0 0.0
        %1824 = vmatprep.subr.mxu0 0.0
        %1825 = vmatpush1.msra.mxu0 0.0
        %1826 = vmatprep.subr.mxu0 0.0
        %1827 = vmatpush1.msra.mxu0 0.0
        %1828 = vmatprep.subr.mxu0 0.0
        %1829 = vmatpush1.msra.mxu0 0.0
        %1830 = vmatprep.subr.mxu0 0.0
        %1831 = vmatpush1.msra.mxu0 0.0
        %1832 = vmatprep.subr.mxu0 0.0
        %1833 = vmatpush1.msra.mxu0 0.0
        %1834 = vmatprep.subr.mxu0 0.0
        %1835 = vmatpush1.msra.mxu0 0.0
        %1836 = vmatprep.subr.mxu0 0.0
        %1837 = vmatpush1.msra.mxu0 %v1799
        %1838 = vmatprep.subr.mxu0 0.0
        %1839 = vmatpush1.msra.mxu0 %v1797
        %1840 = vmatprep.subr.mxu0 0.0
        %1841 = vmatpush2.msra.mxu0 0.0
        %1842 = vmatprep.subr.mxu0 0.0
        %1843 = vmatpush2.msra.mxu0 0.0
        %1844 = vmatprep.subr.mxu0 0.0
        %1845 = vmatpush2.msra.mxu0 0.0
        %1846 = vmatprep.subr.mxu0 0.0
        %1847 = vmatpush2.msra.mxu0 0.0
        %1848 = vmatprep.subr.mxu0 0.0
        %1849 = vmatpush2.msra.mxu0 0.0
        %1850 = vmatprep.subr.mxu0 0.0
        %1851 = vmatpush2.msra.mxu0 0.0
        %1852 = vmatprep.subr.mxu0 0.0
        %1853 = vmatpush2.msra.mxu0 0.0
        %1854 = vmatprep.subr.mxu0 0.0
        %1855 = vmatpush2.msra.mxu0 0.0
        %1856 = vmatprep.subr.mxu0 0.0
        %1857 = vmatpush2.msra.mxu0 0.0
        %1858 = vmatprep.subr.mxu0 0.0
        %1859 = vmatpush2.msra.mxu0 0.0
        %1860 = vmatprep.subr.mxu0 0.0
        %1861 = vmatpush2.msra.mxu0 0.0
        %1862 = vmatprep.subr.mxu0 0.0
        %1863 = vmatpush2.msra.mxu0 0.0
        %1864 = vmatprep.subr.mxu0 0.0
        %1865 = vmatpush2.msra.mxu0 0.0
        %1866 = vmatprep.subr.mxu0 0.0
        %1867 = vmatpush2.msra.mxu0 0.0
        %1868 = vmatprep.subr.mxu0 0.0
        %1869 = vmatpush2.msra.mxu0 0.0
        %1870 = vmatprep.subr.mxu0 0.0
        %1871 = vmatpush2.msra.mxu0 0.0
        %1872 = vmatprep.mubr.f32.mxu0 0.0
        %1873 = vmatmul.mubr.f32.gmra.mxu0 %v1803
        %v1874 = vpop.f32.mrf.mxu0
        %v1875 = vadd.f32 0.0, %v1874
        %v1876 = vpop.f32.mrf.mxu0
        %1877 = vmatprep.mubr.f32.mxu0 0.0
        %1878 = vmatmul.mubr.f32.gmra.mxu0 %v1806
        %v1879 = vpop.f32.mrf.mxu0
        %v1880 = vadd.f32 0.0, %v1879
        %v1881 = vpop.f32.mrf.mxu0
        %1882 = vdwg.mxu0
        %1883 = vrot.lane.b32.xlu0 %v406, 88
        %v1884 = vpop.permute.xlu0 %1883
        %1885 = vrot.lane.b32.xlu0 %v411, 88
        %v1886 = vpop.permute.xlu0 %1885
        %v1890 = vsel %vm294, %v1702, 0
        %v1893 = vsel %vm294, %v1704, 0
        %1895 = vmatprep.subr.mxu0 0.0
        %1896 = vmatpush1.msra.mxu0 0.0
        %1897 = vmatprep.subr.mxu0 0.0
        %1898 = vmatpush1.msra.mxu0 0.0
        %1899 = vmatprep.subr.mxu0 0.0
        %1900 = vmatpush1.msra.mxu0 0.0
        %1901 = vmatprep.subr.mxu0 0.0
        %1902 = vmatpush1.msra.mxu0 0.0
        %1903 = vmatprep.subr.mxu0 0.0
        %1904 = vmatpush1.msra.mxu0 0.0
        %1905 = vmatprep.subr.mxu0 0.0
        %1906 = vmatpush1.msra.mxu0 0.0
        %1907 = vmatprep.subr.mxu0 0.0
        %1908 = vmatpush1.msra.mxu0 0.0
        %1909 = vmatprep.subr.mxu0 0.0
        %1910 = vmatpush1.msra.mxu0 0.0
        %1911 = vmatprep.subr.mxu0 0.0
        %1912 = vmatpush1.msra.mxu0 0.0
        %1913 = vmatprep.subr.mxu0 0.0
        %1914 = vmatpush1.msra.mxu0 0.0
        %1915 = vmatprep.subr.mxu0 0.0
        %1916 = vmatpush1.msra.mxu0 0.0
        %1917 = vmatprep.subr.mxu0 0.0
        %1918 = vmatpush1.msra.mxu0 0.0
        %1919 = vmatprep.subr.mxu0 0.0
        %1920 = vmatpush1.msra.mxu0 0.0
        %1921 = vmatprep.subr.mxu0 0.0
        %1922 = vmatpush1.msra.mxu0 0.0
        %1923 = vmatprep.subr.mxu0 0.0
        %1924 = vmatpush1.msra.mxu0 %v1886
        %1925 = vmatprep.subr.mxu0 0.0
        %1926 = vmatpush1.msra.mxu0 %v1884
        %1927 = vmatprep.subr.mxu0 0.0
        %1928 = vmatpush2.msra.mxu0 0.0
        %1929 = vmatprep.subr.mxu0 0.0
        %1930 = vmatpush2.msra.mxu0 0.0
        %1931 = vmatprep.subr.mxu0 0.0
        %1932 = vmatpush2.msra.mxu0 0.0
        %1933 = vmatprep.subr.mxu0 0.0
        %1934 = vmatpush2.msra.mxu0 0.0
        %1935 = vmatprep.subr.mxu0 0.0
        %1936 = vmatpush2.msra.mxu0 0.0
        %1937 = vmatprep.subr.mxu0 0.0
        %1938 = vmatpush2.msra.mxu0 0.0
        %1939 = vmatprep.subr.mxu0 0.0
        %1940 = vmatpush2.msra.mxu0 0.0
        %1941 = vmatprep.subr.mxu0 0.0
        %1942 = vmatpush2.msra.mxu0 0.0
        %1943 = vmatprep.subr.mxu0 0.0
        %1944 = vmatpush2.msra.mxu0 0.0
        %1945 = vmatprep.subr.mxu0 0.0
        %1946 = vmatpush2.msra.mxu0 0.0
        %1947 = vmatprep.subr.mxu0 0.0
        %1948 = vmatpush2.msra.mxu0 0.0
        %1949 = vmatprep.subr.mxu0 0.0
        %1950 = vmatpush2.msra.mxu0 0.0
        %1951 = vmatprep.subr.mxu0 0.0
        %1952 = vmatpush2.msra.mxu0 0.0
        %1953 = vmatprep.subr.mxu0 0.0
        %1954 = vmatpush2.msra.mxu0 0.0
        %1955 = vmatprep.subr.mxu0 0.0
        %1956 = vmatpush2.msra.mxu0 0.0
        %1957 = vmatprep.subr.mxu0 0.0
        %1958 = vmatpush2.msra.mxu0 0.0
        %1959 = vmatprep.mubr.f32.mxu0 0.0
        %1960 = vmatmul.mubr.f32.gmra.mxu0 %v1890
        %v1961 = vpop.f32.mrf.mxu0
        %v1962 = vadd.f32 0.0, %v1961
        %v1963 = vpop.f32.mrf.mxu0
        %1964 = vmatprep.mubr.f32.mxu0 0.0
        %1965 = vmatmul.mubr.f32.gmra.mxu0 %v1893
        %v1966 = vpop.f32.mrf.mxu0
        %v1967 = vadd.f32 0.0, %v1966
        %v1968 = vpop.f32.mrf.mxu0
        %1969 = vdwg.mxu0
        %1970 = vrot.lane.b32.xlu0 %v416, 88
        %v1971 = vpop.permute.xlu0 %1970
        %1972 = vrot.lane.b32.xlu0 %v421, 88
        %v1973 = vpop.permute.xlu0 %1972
        %v1977 = vsel %vm294, %v1706, 0
        %v1980 = vsel %vm294, %v1708, 0
        %1982 = vmatprep.subr.mxu0 0.0
        %1983 = vmatpush1.msra.mxu0 0.0
        %1984 = vmatprep.subr.mxu0 0.0
        %1985 = vmatpush1.msra.mxu0 0.0
        %1986 = vmatprep.subr.mxu0 0.0
        %1987 = vmatpush1.msra.mxu0 0.0
        %1988 = vmatprep.subr.mxu0 0.0
        %1989 = vmatpush1.msra.mxu0 0.0
        %1990 = vmatprep.subr.mxu0 0.0
        %1991 = vmatpush1.msra.mxu0 0.0
        %1992 = vmatprep.subr.mxu0 0.0
        %1993 = vmatpush1.msra.mxu0 0.0
        %1994 = vmatprep.subr.mxu0 0.0
        %1995 = vmatpush1.msra.mxu0 0.0
        %1996 = vmatprep.subr.mxu0 0.0
        %1997 = vmatpush1.msra.mxu0 0.0
        %1998 = vmatprep.subr.mxu0 0.0
        %1999 = vmatpush1.msra.mxu0 0.0
        %2000 = vmatprep.subr.mxu0 0.0
        %2001 = vmatpush1.msra.mxu0 0.0
        %2002 = vmatprep.subr.mxu0 0.0
        %2003 = vmatpush1.msra.mxu0 0.0
        %2004 = vmatprep.subr.mxu0 0.0
        %2005 = vmatpush1.msra.mxu0 0.0
        %2006 = vmatprep.subr.mxu0 0.0
        %2007 = vmatpush1.msra.mxu0 0.0
        %2008 = vmatprep.subr.mxu0 0.0
        %2009 = vmatpush1.msra.mxu0 0.0
        %2010 = vmatprep.subr.mxu0 0.0
        %2011 = vmatpush1.msra.mxu0 %v1973
        %2012 = vmatprep.subr.mxu0 0.0
        %2013 = vmatpush1.msra.mxu0 %v1971
        %2014 = vmatprep.subr.mxu0 0.0
        %2015 = vmatpush2.msra.mxu0 0.0
        %2016 = vmatprep.subr.mxu0 0.0
        %2017 = vmatpush2.msra.mxu0 0.0
        %2018 = vmatprep.subr.mxu0 0.0
        %2019 = vmatpush2.msra.mxu0 0.0
        %2020 = vmatprep.subr.mxu0 0.0
        %2021 = vmatpush2.msra.mxu0 0.0
        %2022 = vmatprep.subr.mxu0 0.0
        %2023 = vmatpush2.msra.mxu0 0.0
        %2024 = vmatprep.subr.mxu0 0.0
        %2025 = vmatpush2.msra.mxu0 0.0
        %2026 = vmatprep.subr.mxu0 0.0
        %2027 = vmatpush2.msra.mxu0 0.0
        %2028 = vmatprep.subr.mxu0 0.0
        %2029 = vmatpush2.msra.mxu0 0.0
        %2030 = vmatprep.subr.mxu0 0.0
        %2031 = vmatpush2.msra.mxu0 0.0
        %2032 = vmatprep.subr.mxu0 0.0
        %2033 = vmatpush2.msra.mxu0 0.0
        %2034 = vmatprep.subr.mxu0 0.0
        %2035 = vmatpush2.msra.mxu0 0.0
        %2036 = vmatprep.subr.mxu0 0.0
        %2037 = vmatpush2.msra.mxu0 0.0
        %2038 = vmatprep.subr.mxu0 0.0
        %2039 = vmatpush2.msra.mxu0 0.0
        %2040 = vmatprep.subr.mxu0 0.0
        %2041 = vmatpush2.msra.mxu0 0.0
        %2042 = vmatprep.subr.mxu0 0.0
        %2043 = vmatpush2.msra.mxu0 0.0
        %2044 = vmatprep.subr.mxu0 0.0
        %2045 = vmatpush2.msra.mxu0 0.0
        %2046 = vmatprep.mubr.f32.mxu0 0.0
        %2047 = vmatmul.mubr.f32.gmra.mxu0 %v1977
        %v2048 = vpop.f32.mrf.mxu0
        %v2049 = vadd.f32 0.0, %v2048
        %v2050 = vpop.f32.mrf.mxu0
        %2051 = vmatprep.mubr.f32.mxu0 0.0
        %2052 = vmatmul.mubr.f32.gmra.mxu0 %v1980
        %v2053 = vpop.f32.mrf.mxu0
        %v2054 = vadd.f32 0.0, %v2053
        %v2055 = vpop.f32.mrf.mxu0
        %2056 = vdwg.mxu0
        %2065 = vrot.lane.b32.xlu0 %v1788, 8
        %v2066 = vpop.permute.xlu0 %2065
        %2067 = vrot.lane.b32.xlu0 %v1793, 8
        %v2068 = vpop.permute.xlu0 %2067
        %2069 = vrot.lane.b32.xlu0 %v1875, 8
        %v2070 = vpop.permute.xlu0 %2069
        %2071 = vrot.lane.b32.xlu0 %v1880, 8
        %v2072 = vpop.permute.xlu0 %2071
        %2073 = vrot.lane.b32.xlu0 %v1962, 8
        %v2074 = vpop.permute.xlu0 %2073
        %2075 = vrot.lane.b32.xlu0 %v1967, 8
        %v2076 = vpop.permute.xlu0 %2075
        %2077 = vrot.lane.b32.xlu0 %v2049, 8
        %v2078 = vpop.permute.xlu0 %2077
        %2079 = vrot.lane.b32.xlu0 %v2054, 8
        %v2080 = vpop.permute.xlu0 %2079
        %vm2089 = vcmask 130112
        %2090 = vst.msk [vmem:[#allocation2] sm:$0xff] %vm2089, %v2066
        %2091 = vst.msk [vmem:[#allocation2 + $0x8] sm:$0xff] %vm2089, %v2068
        %2092 = vst.msk [vmem:[#allocation2 + $0x10] sm:$0xff] %vm2089, %v2070
        %2093 = vst.msk [vmem:[#allocation2 + $0x18] sm:$0xff] %vm2089, %v2072
        %2094 = vst.msk [vmem:[#allocation2 + $0x20] sm:$0xff] %vm2089, %v2074
        %2095 = vst.msk [vmem:[#allocation2 + $0x28] sm:$0xff] %vm2089, %v2076
        %2096 = vst.msk [vmem:[#allocation2 + $0x30] sm:$0xff] %vm2089, %v2078
        %2097 = vst.msk [vmem:[#allocation2 + $0x38] sm:$0xff] %vm2089, %v2080
        %v2098 = vld [vmem:[#allocation2] sm:$0xff]
        %v2099 = vld [vmem:[#allocation2 + $0x8] sm:$0xff]
        %v2100 = vld [vmem:[#allocation2 + $0x10] sm:$0xff]
        %v2101 = vld [vmem:[#allocation2 + $0x18] sm:$0xff]
        %v2102 = vld [vmem:[#allocation2 + $0x20] sm:$0xff]
        %v2103 = vld [vmem:[#allocation2 + $0x28] sm:$0xff]
        %v2104 = vld [vmem:[#allocation2 + $0x30] sm:$0xff]
        %v2105 = vld [vmem:[#allocation2 + $0x38] sm:$0xff]
        %v2106 = vld [vmem:[#allocation5] sm:$0xff]
        %v2107 = vld [vmem:[#allocation5 + $0x8] sm:$0xff]
        %v2108 = vld [vmem:[%s6] sm:$0x1]
        %v2110 = vlaneseq
        %v2111 = vshrl.u32 %v2110, 7
        %v2112 = vsub.s32 0, %v2111
        %v2113 = vrot.slane %v2108, %v2112
        %v2116 = vsel %vm294, %v2098, 0
        %v2119 = vsel %vm294, %v2099, 0
        %v2122 = vsel %vm294, %v2100, 0
        %v2125 = vsel %vm294, %v2101, 0
        %v2128 = vsel %vm294, %v2102, 0
        %v2131 = vsel %vm294, %v2103, 0
        %v2134 = vsel %vm294, %v2104, 0
        %v2137 = vsel %vm294, %v2105, 0
        %2139 = vmatprep.subr.mxu0 0.0
        %2140 = vmatpush1.msra.mxu0 0.0
        %2141 = vmatprep.subr.mxu0 0.0
        %2142 = vmatpush1.msra.mxu0 0.0
        %2143 = vmatprep.subr.mxu0 0.0
        %2144 = vmatpush1.msra.mxu0 0.0
        %2145 = vmatprep.subr.mxu0 0.0
        %2146 = vmatpush1.msra.mxu0 0.0
        %2147 = vmatprep.subr.mxu0 0.0
        %2148 = vmatpush1.msra.mxu0 0.0
        %2149 = vmatprep.subr.mxu0 0.0
        %2150 = vmatpush1.msra.mxu0 0.0
        %2151 = vmatprep.subr.mxu0 0.0
        %2152 = vmatpush1.msra.mxu0 0.0
        %2153 = vmatprep.subr.mxu0 0.0
        %2154 = vmatpush1.msra.mxu0 0.0
        %2155 = vmatprep.subr.mxu0 0.0
        %2156 = vmatpush1.msra.mxu0 0.0
        %2157 = vmatprep.subr.mxu0 0.0
        %2158 = vmatpush1.msra.mxu0 0.0
        %2159 = vmatprep.subr.mxu0 0.0
        %2160 = vmatpush1.msra.mxu0 0.0
        %2161 = vmatprep.subr.mxu0 0.0
        %2162 = vmatpush1.msra.mxu0 0.0
        %2163 = vmatprep.subr.mxu0 0.0
        %2164 = vmatpush1.msra.mxu0 0.0
        %2165 = vmatprep.subr.mxu0 0.0
        %2166 = vmatpush1.msra.mxu0 0.0
        %2167 = vmatprep.subr.mxu0 0.0
        %2168 = vmatpush1.msra.mxu0 %v2107
        %2169 = vmatprep.subr.mxu0 0.0
        %2170 = vmatpush1.msra.mxu0 %v2106
        %2171 = vmatprep.subr.mxu0 0.0
        %2172 = vmatpush2.msra.mxu0 0.0
        %2173 = vmatprep.subr.mxu0 0.0
        %2174 = vmatpush2.msra.mxu0 0.0
        %2175 = vmatprep.subr.mxu0 0.0
        %2176 = vmatpush2.msra.mxu0 0.0
        %2177 = vmatprep.subr.mxu0 0.0
        %2178 = vmatpush2.msra.mxu0 0.0
        %2179 = vmatprep.subr.mxu0 0.0
        %2180 = vmatpush2.msra.mxu0 0.0
        %2181 = vmatprep.subr.mxu0 0.0
        %2182 = vmatpush2.msra.mxu0 0.0
        %2183 = vmatprep.subr.mxu0 0.0
        %2184 = vmatpush2.msra.mxu0 0.0
        %2185 = vmatprep.subr.mxu0 0.0
        %2186 = vmatpush2.msra.mxu0 0.0
        %2187 = vmatprep.subr.mxu0 0.0
        %2188 = vmatpush2.msra.mxu0 0.0
        %2189 = vmatprep.subr.mxu0 0.0
        %2190 = vmatpush2.msra.mxu0 0.0
        %2191 = vmatprep.subr.mxu0 0.0
        %2192 = vmatpush2.msra.mxu0 0.0
        %2193 = vmatprep.subr.mxu0 0.0
        %2194 = vmatpush2.msra.mxu0 0.0
        %2195 = vmatprep.subr.mxu0 0.0
        %2196 = vmatpush2.msra.mxu0 0.0
        %2197 = vmatprep.subr.mxu0 0.0
        %2198 = vmatpush2.msra.mxu0 0.0
        %2199 = vmatprep.subr.mxu0 0.0
        %2200 = vmatpush2.msra.mxu0 0.0
        %2201 = vmatprep.subr.mxu0 0.0
        %2202 = vmatpush2.msra.mxu0 0.0
        %2203 = vmatprep.mubr.f32.mxu0 0.0
        %2204 = vmatmul.mubr.f32.gmra.mxu0 %v2116
        %v2205 = vpop.f32.mrf.mxu0
        %v2206 = vadd.f32 %v2113, %v2205
        %v2207 = vpop.f32.mrf.mxu0
        %2208 = vmatprep.mubr.f32.mxu0 0.0
        %2209 = vmatmul.mubr.f32.gmra.mxu0 %v2119
        %v2210 = vpop.f32.mrf.mxu0
        %v2211 = vadd.f32 %v2113, %v2210
        %v2212 = vpop.f32.mrf.mxu0
        %2213 = vmatprep.mubr.f32.mxu0 0.0
        %2214 = vmatmul.mubr.f32.gmra.mxu0 %v2122
        %v2215 = vpop.f32.mrf.mxu0
        %v2216 = vadd.f32 %v2113, %v2215
        %v2217 = vpop.f32.mrf.mxu0
        %2218 = vmatprep.mubr.f32.mxu0 0.0
        %2219 = vmatmul.mubr.f32.gmra.mxu0 %v2125
        %v2220 = vpop.f32.mrf.mxu0
        %v2221 = vadd.f32 %v2113, %v2220
        %v2222 = vpop.f32.mrf.mxu0
        %2223 = vmatprep.mubr.f32.mxu0 0.0
        %2224 = vmatmul.mubr.f32.gmra.mxu0 %v2128
        %v2225 = vpop.f32.mrf.mxu0
        %v2226 = vadd.f32 %v2113, %v2225
        %v2227 = vpop.f32.mrf.mxu0
        %2228 = vmatprep.mubr.f32.mxu0 0.0
        %2229 = vmatmul.mubr.f32.gmra.mxu0 %v2131
        %v2230 = vpop.f32.mrf.mxu0
        %v2231 = vadd.f32 %v2113, %v2230
        %v2232 = vpop.f32.mrf.mxu0
        %2233 = vmatprep.mubr.f32.mxu0 0.0
        %2234 = vmatmul.mubr.f32.gmra.mxu0 %v2134
        %v2235 = vpop.f32.mrf.mxu0
        %v2236 = vadd.f32 %v2113, %v2235
        %v2237 = vpop.f32.mrf.mxu0
        %2238 = vmatprep.mubr.f32.mxu0 0.0
        %2239 = vmatmul.mubr.f32.gmra.mxu0 %v2137
        %v2240 = vpop.f32.mrf.mxu0
        %v2241 = vadd.f32 %v2113, %v2240
        %v2242 = vpop.f32.mrf.mxu0
        %2243 = vdwg.mxu0
        %2244 = vst.msk [vmem:[%s275] sm:$0xff] %vm294, %v2206
        %2245 = vst.msk [vmem:[%s275 + $0x8] sm:$0xff] %vm294, %v2211
        %2246 = vst.msk [vmem:[%s275 + $0x10] sm:$0xff] %vm294, %v2216
        %2247 = vst.msk [vmem:[%s275 + $0x18] sm:$0xff] %vm294, %v2221
        %2248 = vst.msk [vmem:[%s275 + $0x20] sm:$0xff] %vm294, %v2226
        %2249 = vst.msk [vmem:[%s275 + $0x28] sm:$0xff] %vm294, %v2231
        %2250 = vst.msk [vmem:[%s275 + $0x30] sm:$0xff] %vm294, %v2236
        %2251 = vst.msk [vmem:[%s275 + $0x38] sm:$0xff] %vm294, %v2241
        %s2252 = smul.u32 8, %s25
        %p2253 = scmp.lt.s32.totalorder %s2252, 15
        %s2254 = scalar_select %p2253, %s2252, 15
        %s2255 = smul.addr %s2254, 8
        %s2256 = scalar_lea.vmem %s7, %s2255
        // Predicated region
        $region49: #{tpu_custom_call.1} parent=43 // pred_check
          %p2257 = pneg %p174
        $region50: #{tpu_custom_call.1} parent=43 // pred_check_branch
          %2259 = sbr.rel (%p2257) target = $region52
        $region51: #{tpu_custom_call.1} parent=43 // pred_region
          %s2260 = smul.u32 8, %s25
        $region52: #{tpu_custom_call.1} parent=43 // pred_fallthru
          _
      $region44: #{tpu_custom_call.1} parent=5 // pred_fallthru
        _
      %p2261 = scmp.le.s32.totalorder 2, %s20
      // Predicated region
      $region53: #{tpu_custom_call.1} parent=5 // pred_check
        %p2262 = pneg %p2261
      $region54: #{tpu_custom_call.1} parent=5 // pred_check_branch
        %2264 = sbr.rel (%p2262) target = $region56
      $region55: #{tpu_custom_call.1} parent=5 // pred_region
        %s2265 = ssub.s32 %s20, 2
        // Predicated region
        $region57: #{tpu_custom_call.1} parent=55 // pred_check
          %p2266 = pneg %p180
        $region58: #{tpu_custom_call.1} parent=55 // pred_check_branch
          %2268 = sbr.rel (%p2266) target = $region60
        $region59: #{tpu_custom_call.1} parent=55 // pred_region
          %s2269 = smul.u32 8, %s26
          %p2270 = scmp.lt.s32.totalorder %s2269, 15
          %s2271 = scalar_select %p2270, %s2269, 15
          %s2272 = smul.addr %s2271, 8
          %s2273 = scalar_lea.vmem %s7, %s2272
        $region60: #{tpu_custom_call.1} parent=55 // pred_fallthru
          _
      $region56: #{tpu_custom_call.1} parent=5 // pred_fallthru
        _
    $region6: #{tpu_custom_call.1} parent=1 // loop_footer
      %s24 = sadd.s32 1, %s20
    $region7: #{tpu_custom_call.1} parent=1 // loop_footer_branch
      %19 = sbr.rel target = $region3
    $region8: #{tpu_custom_call.1} parent=1 // loop_exit
      _
    %2274 = vsyncpa [#allocation6], 1
    %s2275 = scalar_lea.sflag [#allocation6], 1
    %2276 = vsyncpa %s2275, 1

</llo_original>
